<compile_context>
chip_gen: v5e
topology: v5e:2x2
jax: 0.10.0
libtpu: 0.0.40
codegen_flags: <defaults>
</compile_context>

<pallas_src>
import functools

import jax
import jax.numpy as jnp
from jax.experimental import pallas as pl
from jax.experimental.pallas import tpu as pltpu


# ---------------------------------------------------------------------------
# Kernels
# ---------------------------------------------------------------------------

def _mlp_kernel_fused(x_ref, g_ref, b_ref, w1_ref, b1_ref, w2_ref, b2_ref,
                      o_ref, *, eps):
    """Single reduction step: full W1/W2 are VMEM resident. grid = (row_tiles,)."""
    x = x_ref[...].astype(jnp.float32)
    mean = jnp.mean(x, axis=-1, keepdims=True)
    var = jnp.mean(jnp.square(x - mean), axis=-1, keepdims=True)
    xn = (x - mean) * jax.lax.rsqrt(var + eps)
    xn = xn * g_ref[...].astype(jnp.float32) + b_ref[...].astype(jnp.float32)

    h = jnp.dot(xn.astype(w1_ref.dtype), w1_ref[...],
                preferred_element_type=jnp.float32)
    h = jnp.maximum(h + b1_ref[...].astype(jnp.float32), 0.0)
    y = jnp.dot(h.astype(w2_ref.dtype), w2_ref[...],
                preferred_element_type=jnp.float32)
    o_ref[...] = (y + b2_ref[...].astype(jnp.float32)).astype(o_ref.dtype)


def _mlp_kernel_tiled(x_ref, g_ref, b_ref, w1_ref, b1_ref, w2_ref, b2_ref,
                      o_ref, xn_ref, acc_ref, *, eps):
    """grid = (row_tiles, d_mlp_tiles); d_mlp is the inner reduction axis."""
    k = pl.program_id(1)

    @pl.when(k == 0)
    def _init():
        # LayerNorm in f32 (XLU reduce + EUP rsqrt), cast once to the weight
        # dtype and cached so it is not recomputed per reduction step.
        x = x_ref[...].astype(jnp.float32)
        mean = jnp.mean(x, axis=-1, keepdims=True)
        var = jnp.mean(jnp.square(x - mean), axis=-1, keepdims=True)
        xn = (x - mean) * jax.lax.rsqrt(var + eps)
        xn = xn * g_ref[...].astype(jnp.float32) + b_ref[...].astype(jnp.float32)
        xn_ref[...] = xn.astype(xn_ref.dtype)
        acc_ref[...] = jnp.zeros_like(acc_ref)

    # ReLU is elementwise over d_mlp, so per-slab ReLU + accumulation is exact.
    h = jnp.dot(xn_ref[...], w1_ref[...], preferred_element_type=jnp.float32)
    h = jnp.maximum(h + b1_ref[...].astype(jnp.float32), 0.0)
    acc_ref[...] += jnp.dot(h.astype(w2_ref.dtype), w2_ref[...],
                            preferred_element_type=jnp.float32)

    @pl.when(k == pl.num_programs(1) - 1)
    def _finalize():
        o_ref[...] = (acc_ref[...]
                      + b2_ref[...].astype(jnp.float32)).astype(o_ref.dtype)


# ---------------------------------------------------------------------------
# Per-generation policy & tile selection
# ---------------------------------------------------------------------------

def _round_up(x, m):
    return ((x + m - 1) // m) * m


def _round_down(x, m):
    return (x // m) * m


def _tpu_generation():
    try:
        kind = jax.devices()[0].device_kind.lower()
    except Exception:
        return 0
    for gen in (7, 6, 5, 4):
        if f"v{gen}" in kind or f"tpu{gen}" in kind:
            return gen
    return 0


# vmem_budget: scoped-VMEM limit we are willing to use (v7x physical is only
# 64 MiB/TC -> budget 48 MiB; v5e/v6e have 128 MiB -> use ~100/96 MiB).
# tm_target: row-tile target (v6e needs large tm to cross the weight-stream
# ridge).  align: MXU-friendly tile alignment (2x256x256 on v6e/v7x).
# cores: TensorCores fed by the "parallel" row axis.
_GEN_CFG = {
    4: dict(vmem_budget=96 << 20, tm_target=512, align=128, cores=1),
    5: dict(vmem_budget=100 << 20, tm_target=512, align=128, cores=1),
    6: dict(vmem_budget=96 << 20, tm_target=1024, align=256, cores=1),
    7: dict(vmem_budget=48 << 20, tm_target=512, align=256, cores=2),
}
_DEFAULT_CFG = dict(vmem_budget=48 << 20, tm_target=256, align=128, cores=1)


def _generation_config():
    return dict(_GEN_CFG.get(_tpu_generation(), _DEFAULT_CFG))


def _buffered_supported():
    """Whether pl.BlockSpec(..., pipeline_mode=pl.Buffered(1)) is available."""
    if not hasattr(pl, "Buffered"):
        return False
    try:
        pl.BlockSpec((8, 128), lambda i: (0, 0), pipeline_mode=pl.Buffered(1))
        return True
    except Exception:
        return False


def _pick_tile_rows(rows8, target, align, min_tiles):
    """Largest row tile <= target with <=10% padding waste; keeps >= min_tiles
    row tiles (feeds both v7x TensorCores) and prefers MXU-aligned sizes."""
    target = max(8, _round_down(target, 8))
    cap = rows8
    if min_tiles > 1 and rows8 >= min_tiles * 8:
        cap = max(8, _round_down(rows8 // min_tiles, 8))
    target = min(target, cap)

    def waste(tm):
        padded = _round_up(rows8, tm)
        return (padded - rows8) / padded

    if align <= target:
        for tm in range(_round_down(target, align), 0, -align):
            if waste(tm) <= 0.10:
                return tm
    for tm in range(target, 0, -8):
        if waste(tm) <= 0.10:
            return tm
    return 8


def _tk_candidates(d_mlp, align):
    """Valid d_mlp tiles: 128/align-multiples dividing d_mlp, plus d_mlp itself."""
    cands = {d_mlp}
    for step in sorted({align, 128}):
        t = step
        while t < d_mlp:
            if d_mlp % t == 0:
                cands.add(t)
            t += step
    return sorted(cands, reverse=True)


def _select_tiles(rows, d_resid, d_mlp, d_model, x_bytes, w_bytes, out_bytes,
                  cfg, buffered_ok):
    budget = cfg["vmem_budget"]
    align = cfg["align"]
    cores = cfg["cores"]
    tm_target = cfg["tm_target"]
    rows8 = _round_up(rows, 8)

    # 1-row bias/affine operands pad to 8 sublanes in VMEM (double-buffered).
    small = 2 * 8 * (2 * d_resid + d_mlp + d_model) * max(w_bytes, 4)

    # --- Preferred: single reduction step; W1/W2 DMA'd from HBM exactly once
    #     for the whole kernel (constant block index), single-buffered.
    wbuf = 1 if buffered_ok else 2
    w_resident = wbuf * (d_resid * d_mlp + d_mlp * d_model) * w_bytes
    per_row = 2 * d_resid * x_bytes + 2 * d_model * out_bytes
    if w_resident + small <= 0.55 * budget:
        tm_cap = _round_down(int((budget - w_resident - small) // per_row), 8)
        if tm_cap >= min(64, rows8):
            tm = _pick_tile_rows(rows8, min(tm_target, tm_cap), align, cores)
            return tm, d_mlp, True

    # --- Fallback: tile d_mlp as a reduction axis (double-buffered weight
    #     slabs + LN cache + f32 accumulator).  Prefer the largest tk that
    #     fits (fewer accumulator RMW passes; 256-aligned on v6e/v7x).
    for tk in _tk_candidates(d_mlp, align):
        w_slab = 2 * (d_resid + d_model) * tk * w_bytes
        per_row = (2 * d_resid * x_bytes + 2 * d_model * out_bytes
                   + d_resid * w_bytes + 4 * d_model)
        rem = budget - w_slab - small
        if rem <= 0:
            continue
        tm_cap = _round_down(int(rem // per_row), 8)
        if tm_cap < min(64, rows8):
            continue
        tm = _pick_tile_rows(rows8, min(tm_target, tm_cap), align, cores)
        return tm, tk, False

    # --- Last resort: smallest valid slabs, minimal row tile.
    return 8, _tk_candidates(d_mlp, align)[-1], False


# ---------------------------------------------------------------------------
# Wrapper
# ---------------------------------------------------------------------------

def mlp_forward(residual_stream, params, *, d_resid, tile_rows=None,
                tile_mlp=None, eps=1e-5, weight_dtype=None,
                vmem_limit_bytes=None):
    """MLP(x) = max(0, LN(x[..., :d_resid]) W1 + b1) W2 + b2."""
    batch, pos, d_model_in = residual_stream.shape
    gamma, beta = params["ln_gamma"], params["ln_beta"]
    w1, b1 = params["w_inner"], params["b_inner"]
    w2, b2 = params["w_outer"], params["b_outer"]
    if weight_dtype is not None:
        # Optional lower-precision MXU operands (f32 accumulation kept).
        w1 = w1.astype(weight_dtype)
        w2 = w2.astype(weight_dtype)
    d_mlp = w1.shape[1]
    d_model = w2.shape[1]

    rows = batch * pos
    x = residual_stream.reshape(rows, d_model_in)   # free reshape
    if d_resid != d_model_in and d_resid % 128 != 0:
        # Only materialize a sliced HBM copy when the kernel cannot window the
        # leading d_resid lanes directly (block last dim must be 128-aligned
        # or equal the full array dim).
        x = x[:, :d_resid]
    d_cols = x.shape[1]

    cfg = _generation_config()
    budget = int(cfg["vmem_budget"] if vmem_limit_bytes is None
                 else vmem_limit_bytes)
    buffered_ok = _buffered_supported()

    x_bytes = jnp.dtype(x.dtype).itemsize
    w_bytes = jnp.dtype(w1.dtype).itemsize
    out_bytes = jnp.dtype(residual_stream.dtype).itemsize

    tm_auto, tk_auto, _ = _select_tiles(
        rows, d_resid, d_mlp, d_model, x_bytes, w_bytes, out_bytes,
        dict(cfg, vmem_budget=budget), buffered_ok)
    tm = tm_auto if tile_rows is None else tile_rows
    tk = tk_auto if tile_mlp is None else tile_mlp
    assert tm % 8 == 0, "tile_rows must be a multiple of 8"
    assert d_mlp % tk == 0 and (tk == d_mlp or tk % 128 == 0), \
        "tile_mlp must divide d_mlp and be 128-aligned (or equal d_mlp)"
    single_step = (tk == d_mlp)

    padded_rows = _round_up(rows, tm)
    if padded_rows != rows:
        x = jnp.pad(x, ((0, padded_rows - rows), (0, 0)))

    # (1, F) views so biases / LN affine sit lane-major in VMEM.
    gamma2, beta2 = gamma.reshape(1, d_resid), beta.reshape(1, d_resid)
    b1_2, b2_2 = b1.reshape(1, d_mlp), b2.reshape(1, d_model)
    del d_cols  # (only x's column extent; blocks always cover [0, d_resid))

    def _run(use_single_buffer):
        def _spec(shape, index_map, invariant=False):
            if invariant and use_single_buffer:
                return pl.BlockSpec(shape, index_map,
                                    pipeline_mode=pl.Buffered(1))
            return pl.BlockSpec(shape, index_map)

        if single_step:
            grid = (padded_rows // tm,)
            in_specs = [
                _spec((tm, d_resid), lambda i: (i, 0)),                  # x
                _spec((1, d_resid), lambda i: (0, 0), invariant=True),   # gamma
                _spec((1, d_resid), lambda i: (0, 0), invariant=True),   # beta
                _spec((d_resid, d_mlp), lambda i: (0, 0), invariant=True),  # W1
                _spec((1, d_mlp), lambda i: (0, 0), invariant=True),     # b1
                _spec((d_mlp, d_model), lambda i: (0, 0), invariant=True),  # W2
                _spec((1, d_model), lambda i: (0, 0), invariant=True),   # b2
            ]
            out_specs = pl.BlockSpec((tm, d_model), lambda i: (i, 0))
            scratch = []
            kernel = functools.partial(_mlp_kernel_fused, eps=eps)
            semantics = ("parallel",)
        else:
            grid = (padded_rows // tm, d_mlp // tk)
            in_specs = [
                pl.BlockSpec((tm, d_resid), lambda i, k: (i, 0)),     # x rows
                pl.BlockSpec((1, d_resid), lambda i, k: (0, 0)),      # gamma
                pl.BlockSpec((1, d_resid), lambda i, k: (0, 0)),      # beta
                pl.BlockSpec((d_resid, tk), lambda i, k: (0, k)),     # W1 slab
                pl.BlockSpec((1, tk), lambda i, k: (0, k)),           # b1 slab
                pl.BlockSpec((tk, d_model), lambda i, k: (k, 0)),     # W2 slab
                pl.BlockSpec((1, d_model), lambda i, k: (0, 0)),      # b2
            ]
            out_specs = pl.BlockSpec((tm, d_model), lambda i, k: (i, 0))
            scratch = [pltpu.VMEM((tm, d_resid), w1.dtype),      # cached LN(x)
                       pltpu.VMEM((tm, d_model), jnp.float32)]   # f32 acc
            kernel = functools.partial(_mlp_kernel_tiled, eps=eps)
            semantics = ("parallel", "arbitrary")

        return pl.pallas_call(
            kernel,
            out_shape=jax.ShapeDtypeStruct((padded_rows, d_model),
                                           residual_stream.dtype),
            grid_spec=pltpu.PrefetchScalarGridSpec(
                num_scalar_prefetch=0,
                grid=grid,
                in_specs=in_specs,
                out_specs=out_specs,
                scratch_shapes=scratch,
            ),
            compiler_params=pltpu.CompilerParams(
                dimension_semantics=semantics,
                vmem_limit_bytes=budget,
            ),
        )(x, gamma2, beta2, w1, b1_2, w2, b2_2)

    want_single_buffer = buffered_ok and single_step
    try:
        out = _run(want_single_buffer)
    except Exception:
        if not want_single_buffer:
            raise
        out = _run(False)   # fall back to default double-buffered weight blocks

    if padded_rows != rows:
        out = out[:rows]
    return out.reshape(batch, pos, d_model)


# ---------------------------------------------------------------------------
# Params / reference / tests
# ---------------------------------------------------------------------------

def init_params(key, d_resid, d_mlp, d_model, dtype=jnp.float32):
    k1, k2 = jax.random.split(key)
    # kaiming_normal_ on (d_resid, d_mlp): std = sqrt(2 / fan_in), fan_in=d_mlp
    w_inner = jax.random.normal(k1, (d_resid, d_mlp), dtype) * jnp.sqrt(2.0 / d_mlp)
    # xavier_normal_ on (d_mlp, d_model): std = sqrt(2 / (fan_in + fan_out))
    w_outer = jax.random.normal(k2, (d_mlp, d_model), dtype) * jnp.sqrt(
        2.0 / (d_mlp + d_model))
    return {
        "ln_gamma": jnp.ones((d_resid,), dtype),
        "ln_beta": jnp.zeros((d_resid,), dtype),
        "w_inner": w_inner,
        "b_inner": jnp.zeros((d_mlp,), dtype),
        "w_outer": w_outer,
        "b_outer": jnp.zeros((d_model,), dtype),
    }


def _reference(residual_stream, params, *, d_resid, eps=1e-5):
    x = residual_stream[:, :, :d_resid].astype(jnp.float32)
    mean = jnp.mean(x, axis=-1, keepdims=True)
    var = jnp.mean(jnp.square(x - mean), axis=-1, keepdims=True)
    xn = (x - mean) * jax.lax.rsqrt(var + eps)
    xn = xn * params["ln_gamma"].astype(jnp.float32) + params["ln_beta"].astype(jnp.float32)
    h = jnp.maximum(xn @ params["w_inner"].astype(jnp.float32)
                    + params["b_inner"].astype(jnp.float32), 0.0)
    return h @ params["w_outer"].astype(jnp.float32) + params["b_outer"].astype(jnp.float32)


def _check(batch, pos, d_resid, d_mlp, d_model, key, atol=2e-4, rtol=2e-4, **kw):
    kx, kp = jax.random.split(key)
    residual_stream = jax.random.normal(kx, (batch, pos, d_model), jnp.float32)
    params = init_params(kp, d_resid, d_mlp, d_model)
    out = jax.block_until_ready(
        mlp_forward(residual_stream, params, d_resid=d_resid, **kw))
    ref = _reference(residual_stream, params, d_resid=d_resid)
    assert out.shape == (batch, pos, d_model)
    assert jnp.allclose(out, ref, atol=atol, rtol=rtol), "mismatch vs reference"


if __name__ == "__main__":
    key = jax.random.PRNGKey(0)
    k1, k2, k3, k4 = jax.random.split(key, 4)

    # Auto-tiled path (weights fit VMEM -> single reduction step, weights
    # DMA'd once, fused scratch-free kernel).
    _check(batch=2, pos=8, d_resid=128, d_mlp=512, d_model=128, key=k1)

    # Forced d_mlp reduction tiling (2 k-steps) to exercise the accumulator path.
    _check(batch=2, pos=8, d_resid=128, d_mlp=512, d_model=128, key=k2,
           tile_mlp=256)

    # Tiny "toy" config: ragged rows (10 -> padded) + full-dim (non-128) blocks,
    # and d_resid truncation of the residual stream via direct lane windowing.
    _check(batch=2, pos=5, d_resid=32, d_mlp=64, d_model=32, key=k3)
    _check(batch=2, pos=8, d_resid=128, d_mlp=512, d_model=256, key=k4)

    # bf16 weights on the MXU (f32 accumulate) with appropriately looser tolerance.
    _check(batch=2, pos=8, d_resid=128, d_mlp=512, d_model=128, key=k1,
           weight_dtype=jnp.bfloat16, atol=5e-2, rtol=5e-2)

    print("KERNEL_OK")
</pallas_src>

<mosaic_0001>
module attributes {stable_mosaic.version = 11 : i64} {
  func.func @_mlp_kernel_fused(%arg0: i32, %arg1: memref<16x128xf32, #tpu.memory_space<vmem>>, %arg2: memref<1x128xf32, #tpu.memory_space<vmem>>, %arg3: memref<1x128xf32, #tpu.memory_space<vmem>>, %arg4: memref<128x512xf32, #tpu.memory_space<vmem>>, %arg5: memref<1x512xf32, #tpu.memory_space<vmem>>, %arg6: memref<512x128xf32, #tpu.memory_space<vmem>>, %arg7: memref<1x128xf32, #tpu.memory_space<vmem>>, %arg8: memref<16x128xf32, #tpu.memory_space<vmem>>) attributes {dimension_semantics = [#tpu.dimension_semantics<parallel>], iteration_bounds = array<i64: 1>, scalar_prefetch = 0 : i64, scratch_operands = 0 : i64, tpu.core_type = #tpu.core_type<tc>, window_params = [{transform_indices = @transform_0, window_bounds = array<i64: 16, 128>}, {pipeline_mode = #tpu.pipeline_mode<synchronous>, transform_indices = @transform_1, window_bounds = array<i64: 1, 128>}, {pipeline_mode = #tpu.pipeline_mode<synchronous>, transform_indices = @transform_2, window_bounds = array<i64: 1, 128>}, {pipeline_mode = #tpu.pipeline_mode<synchronous>, transform_indices = @transform_3, window_bounds = array<i64: 128, 512>}, {pipeline_mode = #tpu.pipeline_mode<synchronous>, transform_indices = @transform_4, window_bounds = array<i64: 1, 512>}, {pipeline_mode = #tpu.pipeline_mode<synchronous>, transform_indices = @transform_5, window_bounds = array<i64: 512, 128>}, {pipeline_mode = #tpu.pipeline_mode<synchronous>, transform_indices = @transform_6, window_bounds = array<i64: 1, 128>}, {transform_indices = @transform_7, window_bounds = array<i64: 16, 128>}]} {
    %c0 = arith.constant 0 : index
    %c0_0 = arith.constant 0 : index
    %0 = vector.load %arg1[%c0, %c0_0] : memref<16x128xf32, #tpu.memory_space<vmem>>, vector<16x128xf32>
    %cst = arith.constant dense<0.000000e+00> : vector<16xf32>
    %1 = vector.multi_reduction <add>, %0, %cst [1] : vector<16x128xf32> to vector<16xf32>
    %2 = vector.shape_cast %1 : vector<16xf32> to vector<16x1xf32>
    %cst_1 = arith.constant 1.280000e+02 : f32
    %3 = vector.broadcast %cst_1 : f32 to vector<16x1xf32>
    %4 = arith.divf %2, %3 : vector<16x1xf32>
    %5 = vector.broadcast %4 : vector<16x1xf32> to vector<16x128xf32>
    %6 = arith.subf %0, %5 : vector<16x128xf32>
    %7 = arith.mulf %6, %6 : vector<16x128xf32>
    %cst_2 = arith.constant dense<0.000000e+00> : vector<16xf32>
    %8 = vector.multi_reduction <add>, %7, %cst_2 [1] : vector<16x128xf32> to vector<16xf32>
    %9 = vector.shape_cast %8 : vector<16xf32> to vector<16x1xf32>
    %cst_3 = arith.constant 1.280000e+02 : f32
    %10 = vector.broadcast %cst_3 : f32 to vector<16x1xf32>
    %11 = arith.divf %9, %10 : vector<16x1xf32>
    %12 = vector.broadcast %4 : vector<16x1xf32> to vector<16x128xf32>
    %13 = arith.subf %0, %12 : vector<16x128xf32>
    %cst_4 = arith.constant 9.99999974E-6 : f32
    %14 = vector.broadcast %cst_4 : f32 to vector<16x1xf32>
    %15 = arith.addf %11, %14 : vector<16x1xf32>
    %16 = math.rsqrt %15 : vector<16x1xf32>
    %17 = vector.broadcast %16 : vector<16x1xf32> to vector<16x128xf32>
    %18 = arith.mulf %13, %17 : vector<16x128xf32>
    %c0_5 = arith.constant 0 : index
    %c0_6 = arith.constant 0 : index
    %19 = vector.load %arg2[%c0_5, %c0_6] : memref<1x128xf32, #tpu.memory_space<vmem>>, vector<1x128xf32>
    %20 = vector.broadcast %19 : vector<1x128xf32> to vector<16x128xf32>
    %21 = arith.mulf %18, %20 : vector<16x128xf32>
    %c0_7 = arith.constant 0 : index
    %c0_8 = arith.constant 0 : index
    %22 = vector.load %arg3[%c0_7, %c0_8] : memref<1x128xf32, #tpu.memory_space<vmem>>, vector<1x128xf32>
    %23 = vector.broadcast %22 : vector<1x128xf32> to vector<16x128xf32>
    %24 = arith.addf %21, %23 : vector<16x128xf32>
    %c0_9 = arith.constant 0 : index
    %c0_10 = arith.constant 0 : index
    %25 = vector.load %arg4[%c0_9, %c0_10] : memref<128x512xf32, #tpu.memory_space<vmem>>, vector<128x512xf32>
    %cst_11 = arith.constant dense<0.000000e+00> : vector<16x512xf32>
    %26 = tpu.matmul %24, %25, %cst_11 {dimension_numbers = #tpu.dot_dimension_numbers<[1], [0], [0], [1], [0, 0, 1, 1], [], []>} : vector<16x128xf32>, vector<128x512xf32>, vector<16x512xf32> -> vector<16x512xf32>
    %c0_12 = arith.constant 0 : index
    %c0_13 = arith.constant 0 : index
    %27 = vector.load %arg5[%c0_12, %c0_13] : memref<1x512xf32, #tpu.memory_space<vmem>>, vector<1x512xf32>
    %28 = vector.broadcast %27 : vector<1x512xf32> to vector<16x512xf32>
    %29 = arith.addf %26, %28 : vector<16x512xf32>
    %cst_14 = arith.constant 0.000000e+00 : f32
    %30 = vector.broadcast %cst_14 : f32 to vector<16x512xf32>
    %31 = arith.maximumf %29, %30 : vector<16x512xf32>
    %c0_15 = arith.constant 0 : index
    %c0_16 = arith.constant 0 : index
    %32 = vector.load %arg6[%c0_15, %c0_16] : memref<512x128xf32, #tpu.memory_space<vmem>>, vector<512x128xf32>
    %cst_17 = arith.constant dense<0.000000e+00> : vector<16x128xf32>
    %33 = tpu.matmul %31, %32, %cst_17 {dimension_numbers = #tpu.dot_dimension_numbers<[1], [0], [0], [1], [0, 0, 1, 1], [], []>} : vector<16x512xf32>, vector<512x128xf32>, vector<16x128xf32> -> vector<16x128xf32>
    %c0_18 = arith.constant 0 : index
    %c0_19 = arith.constant 0 : index
    %34 = vector.load %arg7[%c0_18, %c0_19] : memref<1x128xf32, #tpu.memory_space<vmem>>, vector<1x128xf32>
    %35 = vector.broadcast %34 : vector<1x128xf32> to vector<16x128xf32>
    %36 = arith.addf %33, %35 : vector<16x128xf32>
    %c0_20 = arith.constant 0 : index
    %c0_21 = arith.constant 0 : index
    %37 = vector.load %arg8[%c0_20, %c0_21] : memref<16x128xf32, #tpu.memory_space<vmem>>, vector<16x128xf32>
    tpu.vector_store %arg8[%c0_20, %c0_21], %36 {strides = array<i32>} : memref<16x128xf32, #tpu.memory_space<vmem>>, vector<16x128xf32>,
    return
  }
  func.func @transform_0(%arg0: i32) -> (i32, i32) {
    %c0_i32 = arith.constant 0 : i32
    %c0_i32_0 = arith.constant 0 : i32
    return %arg0, %c0_i32 : i32, i32
  }
  func.func @transform_1(%arg0: i32) -> (i32, i32) {
    %c0_i32 = arith.constant 0 : i32
    %c0_i32_0 = arith.constant 0 : i32
    %c0_i32_1 = arith.constant 0 : i32
    return %c0_i32, %c0_i32_0 : i32, i32
  }
  func.func @transform_2(%arg0: i32) -> (i32, i32) {
    %c0_i32 = arith.constant 0 : i32
    %c0_i32_0 = arith.constant 0 : i32
    %c0_i32_1 = arith.constant 0 : i32
    return %c0_i32, %c0_i32_0 : i32, i32
  }
  func.func @transform_3(%arg0: i32) -> (i32, i32) {
    %c0_i32 = arith.constant 0 : i32
    %c0_i32_0 = arith.constant 0 : i32
    %c0_i32_1 = arith.constant 0 : i32
    return %c0_i32, %c0_i32_0 : i32, i32
  }
  func.func @transform_4(%arg0: i32) -> (i32, i32) {
    %c0_i32 = arith.constant 0 : i32
    %c0_i32_0 = arith.constant 0 : i32
    %c0_i32_1 = arith.constant 0 : i32
    return %c0_i32, %c0_i32_0 : i32, i32
  }
  func.func @transform_5(%arg0: i32) -> (i32, i32) {
    %c0_i32 = arith.constant 0 : i32
    %c0_i32_0 = arith.constant 0 : i32
    %c0_i32_1 = arith.constant 0 : i32
    return %c0_i32, %c0_i32_0 : i32, i32
  }
  func.func @transform_6(%arg0: i32) -> (i32, i32) {
    %c0_i32 = arith.constant 0 : i32
    %c0_i32_0 = arith.constant 0 : i32
    %c0_i32_1 = arith.constant 0 : i32
    return %c0_i32, %c0_i32_0 : i32, i32
  }
  func.func @transform_7(%arg0: i32) -> (i32, i32) {
    %c0_i32 = arith.constant 0 : i32
    %c0_i32_0 = arith.constant 0 : i32
    return %arg0, %c0_i32 : i32, i32
  }
}

module attributes {stable_mosaic.version = 11 : i64} {
  func.func @_mlp_kernel_fused(%arg0: i32, %arg1: memref<16x128xf32, #tpu.memory_space<vmem>>, %arg2: memref<1x128xf32, #tpu.memory_space<vmem>>, %arg3: memref<1x128xf32, #tpu.memory_space<vmem>>, %arg4: memref<128x512xf32, #tpu.memory_space<vmem>>, %arg5: memref<1x512xf32, #tpu.memory_space<vmem>>, %arg6: memref<512x128xf32, #tpu.memory_space<vmem>>, %arg7: memref<1x128xf32, #tpu.memory_space<vmem>>, %arg8: memref<16x128xf32, #tpu.memory_space<vmem>>) attributes {dimension_semantics = [#tpu.dimension_semantics<parallel>], iteration_bounds = array<i64: 1>, scalar_prefetch = 0 : i64, scratch_operands = 0 : i64, tpu.core_type = #tpu.core_type<tc>, window_params = [{transform_indices = @transform_0, window_bounds = array<i64: 16, 128>}, {pipeline_mode = #tpu.pipeline_mode<synchronous>, transform_indices = @transform_1, window_bounds = array<i64: 1, 128>}, {pipeline_mode = #tpu.pipeline_mode<synchronous>, transform_indices = @transform_2, window_bounds = array<i64: 1, 128>}, {pipeline_mode = #tpu.pipeline_mode<synchronous>, transform_indices = @transform_3, window_bounds = array<i64: 128, 512>}, {pipeline_mode = #tpu.pipeline_mode<synchronous>, transform_indices = @transform_4, window_bounds = array<i64: 1, 512>}, {pipeline_mode = #tpu.pipeline_mode<synchronous>, transform_indices = @transform_5, window_bounds = array<i64: 512, 128>}, {pipeline_mode = #tpu.pipeline_mode<synchronous>, transform_indices = @transform_6, window_bounds = array<i64: 1, 128>}, {transform_indices = @transform_7, window_bounds = array<i64: 16, 128>}]} {
    %c0 = arith.constant 0 : index
    %c0_0 = arith.constant 0 : index
    %0 = vector.load %arg1[%c0, %c0_0] : memref<16x128xf32, #tpu.memory_space<vmem>>, vector<16x128xf32>
    %cst = arith.constant dense<0.000000e+00> : vector<16xf32>
    %1 = vector.multi_reduction <add>, %0, %cst [1] : vector<16x128xf32> to vector<16xf32>
    %2 = vector.shape_cast %1 : vector<16xf32> to vector<16x1xf32>
    %cst_1 = arith.constant 1.280000e+02 : f32
    %3 = vector.broadcast %cst_1 : f32 to vector<16x1xf32>
    %4 = arith.divf %2, %3 : vector<16x1xf32>
    %5 = vector.broadcast %4 : vector<16x1xf32> to vector<16x128xf32>
    %6 = arith.subf %0, %5 : vector<16x128xf32>
    %7 = arith.mulf %6, %6 : vector<16x128xf32>
    %cst_2 = arith.constant dense<0.000000e+00> : vector<16xf32>
    %8 = vector.multi_reduction <add>, %7, %cst_2 [1] : vector<16x128xf32> to vector<16xf32>
    %9 = vector.shape_cast %8 : vector<16xf32> to vector<16x1xf32>
    %cst_3 = arith.constant 1.280000e+02 : f32
    %10 = vector.broadcast %cst_3 : f32 to vector<16x1xf32>
    %11 = arith.divf %9, %10 : vector<16x1xf32>
    %12 = vector.broadcast %4 : vector<16x1xf32> to vector<16x128xf32>
    %13 = arith.subf %0, %12 : vector<16x128xf32>
    %cst_4 = arith.constant 9.99999974E-6 : f32
    %14 = vector.broadcast %cst_4 : f32 to vector<16x1xf32>
    %15 = arith.addf %11, %14 : vector<16x1xf32>
    %16 = math.rsqrt %15 : vector<16x1xf32>
    %17 = vector.broadcast %16 : vector<16x1xf32> to vector<16x128xf32>
    %18 = arith.mulf %13, %17 : vector<16x128xf32>
    %c0_5 = arith.constant 0 : index
    %c0_6 = arith.constant 0 : index
    %19 = vector.load %arg2[%c0_5, %c0_6] : memref<1x128xf32, #tpu.memory_space<vmem>>, vector<1x128xf32>
    %20 = vector.broadcast %19 : vector<1x128xf32> to vector<16x128xf32>
    %21 = arith.mulf %18, %20 : vector<16x128xf32>
    %c0_7 = arith.constant 0 : index
    %c0_8 = arith.constant 0 : index
    %22 = vector.load %arg3[%c0_7, %c0_8] : memref<1x128xf32, #tpu.memory_space<vmem>>, vector<1x128xf32>
    %23 = vector.broadcast %22 : vector<1x128xf32> to vector<16x128xf32>
    %24 = arith.addf %21, %23 : vector<16x128xf32>
    %c0_9 = arith.constant 0 : index
    %c0_10 = arith.constant 0 : index
    %25 = vector.load %arg4[%c0_9, %c0_10] : memref<128x512xf32, #tpu.memory_space<vmem>>, vector<128x512xf32>
    %cst_11 = arith.constant dense<0.000000e+00> : vector<16x512xf32>
    %26 = tpu.matmul %24, %25, %cst_11 {dimension_numbers = #tpu.dot_dimension_numbers<[1], [0], [0], [1], [0, 0, 1, 1], [], []>} : vector<16x128xf32>, vector<128x512xf32>, vector<16x512xf32> -> vector<16x512xf32>
    %c0_12 = arith.constant 0 : index
    %c0_13 = arith.constant 0 : index
    %27 = vector.load %arg5[%c0_12, %c0_13] : memref<1x512xf32, #tpu.memory_space<vmem>>, vector<1x512xf32>
    %28 = vector.broadcast %27 : vector<1x512xf32> to vector<16x512xf32>
    %29 = arith.addf %26, %28 : vector<16x512xf32>
    %cst_14 = arith.constant 0.000000e+00 : f32
    %30 = vector.broadcast %cst_14 : f32 to vector<16x512xf32>
    %31 = arith.maximumf %29, %30 : vector<16x512xf32>
    %c0_15 = arith.constant 0 : index
    %c0_16 = arith.constant 0 : index
    %32 = vector.load %arg6[%c0_15, %c0_16] : memref<512x128xf32, #tpu.memory_space<vmem>>, vector<512x128xf32>
    %cst_17 = arith.constant dense<0.000000e+00> : vector<16x128xf32>
    %33 = tpu.matmul %31, %32, %cst_17 {dimension_numbers = #tpu.dot_dimension_numbers<[1], [0], [0], [1], [0, 0, 1, 1], [], []>} : vector<16x512xf32>, vector<512x128xf32>, vector<16x128xf32> -> vector<16x128xf32>
    %c0_18 = arith.constant 0 : index
    %c0_19 = arith.constant 0 : index
    %34 = vector.load %arg7[%c0_18, %c0_19] : memref<1x128xf32, #tpu.memory_space<vmem>>, vector<1x128xf32>
    %35 = vector.broadcast %34 : vector<1x128xf32> to vector<16x128xf32>
    %36 = arith.addf %33, %35 : vector<16x128xf32>
    %c0_20 = arith.constant 0 : index
    %c0_21 = arith.constant 0 : index
    %37 = vector.load %arg8[%c0_20, %c0_21] : memref<16x128xf32, #tpu.memory_space<vmem>>, vector<16x128xf32>
    tpu.vector_store %arg8[%c0_20, %c0_21], %36 {strides = array<i32>} : memref<16x128xf32, #tpu.memory_space<vmem>>, vector<16x128xf32>,
    return
  }
  func.func @transform_0(%arg0: i32) -> (i32, i32) {
    %c0_i32 = arith.constant 0 : i32
    %c0_i32_0 = arith.constant 0 : i32
    return %arg0, %c0_i32 : i32, i32
  }
  func.func @transform_1(%arg0: i32) -> (i32, i32) {
    %c0_i32 = arith.constant 0 : i32
    %c0_i32_0 = arith.constant 0 : i32
    %c0_i32_1 = arith.constant 0 : i32
    return %c0_i32, %c0_i32_0 : i32, i32
  }
  func.func @transform_2(%arg0: i32) -> (i32, i32) {
    %c0_i32 = arith.constant 0 : i32
    %c0_i32_0 = arith.constant 0 : i32
    %c0_i32_1 = arith.constant 0 : i32
    return %c0_i32, %c0_i32_0 : i32, i32
  }
  func.func @transform_3(%arg0: i32) -> (i32, i32) {
    %c0_i32 = arith.constant 0 : i32
    %c0_i32_0 = arith.constant 0 : i32
    %c0_i32_1 = arith.constant 0 : i32
    return %c0_i32, %c0_i32_0 : i32, i32
  }
  func.func @transform_4(%arg0: i32) -> (i32, i32) {
    %c0_i32 = arith.constant 0 : i32
    %c0_i32_0 = arith.constant 0 : i32
    %c0_i32_1 = arith.constant 0 : i32
    return %c0_i32, %c0_i32_0 : i32, i32
  }
  func.func @transform_5(%arg0: i32) -> (i32, i32) {
    %c0_i32 = arith.constant 0 : i32
    %c0_i32_0 = arith.constant 0 : i32
    %c0_i32_1 = arith.constant 0 : i32
    return %c0_i32, %c0_i32_0 : i32, i32
  }
  func.func @transform_6(%arg0: i32) -> (i32, i32) {
    %c0_i32 = arith.constant 0 : i32
    %c0_i32_0 = arith.constant 0 : i32
    %c0_i32_1 = arith.constant 0 : i32
    return %c0_i32, %c0_i32_0 : i32, i32
  }
  func.func @transform_7(%arg0: i32) -> (i32, i32) {
    %c0_i32 = arith.constant 0 : i32
    %c0_i32_0 = arith.constant 0 : i32
    return %arg0, %c0_i32 : i32, i32
  }
}

</mosaic_0001>

<llo_original>
// kernel: tpu_custom_call.1
$region0: #{tpu_custom_call.1}
  #allocation0 [shape = 'u32[]', space=smem, size = 0x4, offset = 0x4, fixed_abs, tag = 'smem constant byte address 0x4 - core index']
  #allocation1 [shape = 'u32[72,128]{1,0:T(1,128)}', space=vmem, size = 0x9000, scoped, tag = 'internal scratch']
  %s0 = inlined_call_operand.hbm [shape: f32[16,128], index: 0, kind: input, shape index: {}]
  %s1 = inlined_call_operand.hbm [shape: f32[1,128], index: 1, kind: input, shape index: {}]
  %s2 = inlined_call_operand.vmem [shape: f32[1,128], index: 2, kind: input, shape index: {}]
  %s3 = inlined_call_operand.hbm [shape: f32[128,512], index: 3, kind: input, shape index: {}]
  %s4 = inlined_call_operand.hbm [shape: f32[1,512], index: 4, kind: input, shape index: {}]
  %s5 = inlined_call_operand.hbm [shape: f32[512,128], index: 5, kind: input, shape index: {}]
  %s6 = inlined_call_operand.vmem [shape: f32[1,128], index: 6, kind: input, shape index: {}]
  %s7 = inlined_call_operand.hbm [shape: f32[16,128], index: 7, kind: output, shape index: {}]
  %s8 = sld [smem:[#allocation0]]
  $region58: #{tpu_custom_call.1} parent=0
    _
  %s10 = ssub.s32 1, %s8
  %s11 = scalar_select 0, %s10, %s8
  $region1: #{tpu_custom_call.1} parent=0
    #allocation2 [shape = 'u8[8192]{0}', space=vmem, size = 0x2000, scoped, tag = 'input window, operand 0, single buffered']
    #allocation3 [shape = 's32[1]{0}', space=sflag, size = 0x4, scoped, tag = 'scoped memory for tpu_custom_call.1']
    #allocation4 [shape = 's32[1]{0}', space=sflag, size = 0x4, scoped, tag = 'scoped memory for tpu_custom_call.1']
    #allocation5 [shape = 'u8[512]{0}', space=vmem, size = 0x400, scoped, tag = 'input window, operand 1, single buffered']
    #allocation6 [shape = 's32[1]{0}', space=sflag, size = 0x4, scoped, tag = 'scoped memory for tpu_custom_call.1']
    #allocation7 [shape = 'u8[262144]{0}', space=vmem, size = 0x40000, scoped, tag = 'input window, operand 3, single buffered']
    #allocation8 [shape = 'u8[2048]{0}', space=vmem, size = 0x800, scoped, tag = 'input window, operand 4, single buffered']
    #allocation9 [shape = 's32[1]{0}', space=sflag, size = 0x4, scoped, tag = 'scoped memory for tpu_custom_call.1']
    #allocation10 [shape = 'u8[262144]{0}', space=vmem, size = 0x40000, scoped, tag = 'input window, operand 5, single buffered']
    #allocation11 [shape = 'u8[8192]{0}', space=vmem, size = 0x2000, scoped, tag = 'output window, operand 0, single buffered']
    %12 = vsyncpa [#allocation3], 0
    %13 = vsyncpa [#allocation6], 0
    %14 = vsyncpa [#allocation9], 0
    %15 = vsyncpa [#allocation4], 0
    // Predicated region
    $region2: #{tpu_custom_call.1} parent=1 // pred_check
      _
    $region3: #{tpu_custom_call.1} parent=1 // pred_check_branch
      %17 = sbr.rel (0) target = $region5
    $region4: #{tpu_custom_call.1} parent=1 // pred_region
      %19 = vsyncadd [#allocation3], 0
      %s20 = sshll.u32 %s0, 4
      %s21 = int_to_ptr.hbm [resolvable:$true] %s20
      %s22 = sshll.u32 [#allocation2], 4
      %s23 = int_to_ptr.vmem [resolvable:$true] %s22
      %28 = dma.hbm_to_vmem [thread:$0]  %s21, 256, %s23, [#allocation3], 128, 128, 8
    $region5: #{tpu_custom_call.1} parent=1 // pred_fallthru
      _
    // Predicated region
    $region6: #{tpu_custom_call.1} parent=1 // pred_check
      _
    $region7: #{tpu_custom_call.1} parent=1 // pred_check_branch
      %30 = sbr.rel (0) target = $region9
    $region8: #{tpu_custom_call.1} parent=1 // pred_region
      %32 = vsyncadd [#allocation6], 0
      %s34 = sshll.u32 %s1, 4
      %s35 = int_to_ptr.hbm [resolvable:$true] %s34
      %s36 = sshll.u32 [#allocation5], 4
      %s37 = int_to_ptr.vmem [resolvable:$true] %s36
      %39 = dma.hbm_to_vmem [thread:$0]  %s35, 16, %s37, [#allocation6]
    $region9: #{tpu_custom_call.1} parent=1 // pred_fallthru
      _
    // Predicated region
    $region10: #{tpu_custom_call.1} parent=1 // pred_check
      _
    $region11: #{tpu_custom_call.1} parent=1 // pred_check_branch
      %41 = sbr.rel (0) target = $region13
    $region12: #{tpu_custom_call.1} parent=1 // pred_region
      _
    $region13: #{tpu_custom_call.1} parent=1 // pred_fallthru
      _
    // Predicated region
    $region14: #{tpu_custom_call.1} parent=1 // pred_check
      _
    $region15: #{tpu_custom_call.1} parent=1 // pred_check_branch
      %43 = sbr.rel (0) target = $region17
    $region16: #{tpu_custom_call.1} parent=1 // pred_region
      %45 = vsyncadd [#allocation6], 0
      %s46 = sshll.u32 %s3, 4
      %s47 = int_to_ptr.hbm [resolvable:$true] %s46
      %s48 = sshll.u32 [#allocation7], 4
      %s49 = int_to_ptr.vmem [resolvable:$true] %s48
      %54 = dma.hbm_to_vmem [thread:$0]  %s47, 8192, %s49, [#allocation6], 512, 512, 32
    $region17: #{tpu_custom_call.1} parent=1 // pred_fallthru
      _
    // Predicated region
    $region18: #{tpu_custom_call.1} parent=1 // pred_check
      _
    $region19: #{tpu_custom_call.1} parent=1 // pred_check_branch
      %56 = sbr.rel (0) target = $region21
    $region20: #{tpu_custom_call.1} parent=1 // pred_region
      %58 = vsyncadd [#allocation9], 0
      %s60 = sshll.u32 %s4, 4
      %s61 = int_to_ptr.hbm [resolvable:$true] %s60
      %s62 = sshll.u32 [#allocation8], 4
      %s63 = int_to_ptr.vmem [resolvable:$true] %s62
      %65 = dma.hbm_to_vmem [thread:$0]  %s61, 64, %s63, [#allocation9]
    $region21: #{tpu_custom_call.1} parent=1 // pred_fallthru
      _
    // Predicated region
    $region22: #{tpu_custom_call.1} parent=1 // pred_check
      _
    $region23: #{tpu_custom_call.1} parent=1 // pred_check_branch
      %67 = sbr.rel (0) target = $region25
    $region24: #{tpu_custom_call.1} parent=1 // pred_region
      %69 = vsyncadd [#allocation9], 0
      %s70 = sshll.u32 %s5, 4
      %s71 = int_to_ptr.hbm [resolvable:$true] %s70
      %s72 = sshll.u32 [#allocation10], 4
      %s73 = int_to_ptr.vmem [resolvable:$true] %s72
      %78 = dma.hbm_to_vmem [thread:$0]  %s71, 8192, %s73, [#allocation9], 128, 128, 8
    $region25: #{tpu_custom_call.1} parent=1 // pred_fallthru
      _
    // Predicated region
    $region26: #{tpu_custom_call.1} parent=1 // pred_check
      _
    $region27: #{tpu_custom_call.1} parent=1 // pred_check_branch
      %80 = sbr.rel (0) target = $region29
    $region28: #{tpu_custom_call.1} parent=1 // pred_region
      _
    $region29: #{tpu_custom_call.1} parent=1 // pred_fallthru
      _
    // Predicated region
    $region30: #{tpu_custom_call.1} parent=1 // pred_check
      _
    $region31: #{tpu_custom_call.1} parent=1 // pred_check_branch
      %82 = sbr.rel (0) target = $region33
    $region32: #{tpu_custom_call.1} parent=1 // pred_region
      %84 = dma.done [#allocation3], 256
    $region33: #{tpu_custom_call.1} parent=1 // pred_fallthru
      _
    // Predicated region
    $region34: #{tpu_custom_call.1} parent=1 // pred_check
      _
    $region35: #{tpu_custom_call.1} parent=1 // pred_check_branch
      %86 = sbr.rel (0) target = $region37
    $region36: #{tpu_custom_call.1} parent=1 // pred_region
      %88 = dma.done [#allocation6], 16
    $region37: #{tpu_custom_call.1} parent=1 // pred_fallthru
      _
    // Predicated region
    $region38: #{tpu_custom_call.1} parent=1 // pred_check
      _
    $region39: #{tpu_custom_call.1} parent=1 // pred_check_branch
      %90 = sbr.rel (0) target = $region41
    $region40: #{tpu_custom_call.1} parent=1 // pred_region
      %92 = dma.done [#allocation6], 8192
    $region41: #{tpu_custom_call.1} parent=1 // pred_fallthru
      _
    // Predicated region
    $region42: #{tpu_custom_call.1} parent=1 // pred_check
      _
    $region43: #{tpu_custom_call.1} parent=1 // pred_check_branch
      %94 = sbr.rel (0) target = $region45
    $region44: #{tpu_custom_call.1} parent=1 // pred_region
      %96 = dma.done [#allocation9], 64
    $region45: #{tpu_custom_call.1} parent=1 // pred_fallthru
      _
    // Predicated region
    $region46: #{tpu_custom_call.1} parent=1 // pred_check
      _
    $region47: #{tpu_custom_call.1} parent=1 // pred_check_branch
      %98 = sbr.rel (0) target = $region49
    $region48: #{tpu_custom_call.1} parent=1 // pred_region
      %100 = dma.done [#allocation9], 8192
    $region49: #{tpu_custom_call.1} parent=1 // pred_fallthru
      _
    %v101 = vld [vmem:[#allocation2] sm:$0xff]
    %v102 = vld [vmem:[#allocation2 + $0x8] sm:$0xff]
    %103 = vadd.xlane.f32.xlu0 %v101
    %v104 = vpop.xlane.xlu0 %103
    %105 = vadd.xlane.f32.xlu0 %v102
    %v106 = vpop.xlane.xlu0 %105
    %v107 = vrcp.pop 128.0
    %v108 = vmul.f32 128.0, %v107
    %v109 = vsub.f32 1.0, %v108
    %v110 = vmul.f32 %v107, %v109
    %v111 = vadd.f32 %v107, %v110
    %vm112 = vweird.f32 %v107
    %v113 = vsel %vm112, %v107, %v111
    %v114 = vmul.f32 %v104, %v113
    %v115 = vmul.f32 %v106, %v113
    %v116 = vsub.f32 %v101, %v114
    %v117 = vsub.f32 %v102, %v115
    %v118 = vmul.f32 %v116, %v116
    %v119 = vmul.f32 %v117, %v117
    %120 = vadd.xlane.f32.xlu0 %v118
    %v121 = vpop.xlane.xlu0 %120
    %122 = vadd.xlane.f32.xlu0 %v119
    %v123 = vpop.xlane.xlu0 %122
    %v124 = vmul.f32 %v121, %v113
    %v125 = vmul.f32 %v123, %v113
    %v126 = vadd.f32 %v124, 1e-05
    %v127 = vadd.f32 %v125, 1e-05
    %v128 = vrsqrt.pop %v126
    %v129 = vmul.f32 %v128, %v126
    %v130 = vmul.f32 %v129, %v128
    %v131 = vmul.f32 0.5, %v130
    %v132 = vsub.f32 1.5, %v131
    %v133 = vmul.f32 %v128, %v132
    %vm134 = vweird.f32 %v126
    %vm135 = vweird.f32 %v128
    %vm136 = vmor %vm134, %vm135
    %v137 = vsel %vm136, %v128, %v133
    %v138 = vrsqrt.pop %v127
    %v139 = vmul.f32 %v138, %v127
    %v140 = vmul.f32 %v139, %v138
    %v141 = vmul.f32 0.5, %v140
    %v142 = vsub.f32 1.5, %v141
    %v143 = vmul.f32 %v138, %v142
    %vm144 = vweird.f32 %v127
    %vm145 = vweird.f32 %v138
    %vm146 = vmor %vm144, %vm145
    %v147 = vsel %vm146, %v138, %v143
    %v148 = vmul.f32 %v116, %v137
    %v149 = vmul.f32 %v117, %v147
    %v150 = vld [vmem:[#allocation5] sm:$0x1]
    %v152 = vperm.slane %v150, 0
    %v154 = vmul.f32 %v148, %v152
    %v155 = vmul.f32 %v149, %v152
    %v156 = vld [vmem:[%s2] sm:$0x1]
    %v158 = vperm.slane %v156, 0
    %v160 = vadd.f32 %v154, %v158
    %v161 = vadd.f32 %v155, %v158
    %v162 = vld [vmem:[#allocation7] sm:$0xff]
    %v163 = vld [vmem:[#allocation7 + $0x8] sm:$0xff]
    %v164 = vld [vmem:[#allocation7 + $0x10] sm:$0xff]
    %v165 = vld [vmem:[#allocation7 + $0x18] sm:$0xff]
    %v166 = vld [vmem:[#allocation7 + $0x20] sm:$0xff]
    %v167 = vld [vmem:[#allocation7 + $0x28] sm:$0xff]
    %v168 = vld [vmem:[#allocation7 + $0x30] sm:$0xff]
    %v169 = vld [vmem:[#allocation7 + $0x38] sm:$0xff]
    %v170 = vld [vmem:[#allocation7 + $0x40] sm:$0xff]
    %v171 = vld [vmem:[#allocation7 + $0x48] sm:$0xff]
    %v172 = vld [vmem:[#allocation7 + $0x50] sm:$0xff]
    %v173 = vld [vmem:[#allocation7 + $0x58] sm:$0xff]
    %v174 = vld [vmem:[#allocation7 + $0x60] sm:$0xff]
    %v175 = vld [vmem:[#allocation7 + $0x68] sm:$0xff]
    %v176 = vld [vmem:[#allocation7 + $0x70] sm:$0xff]
    %v177 = vld [vmem:[#allocation7 + $0x78] sm:$0xff]
    %v178 = vld [vmem:[#allocation7 + $0x80] sm:$0xff]
    %v179 = vld [vmem:[#allocation7 + $0x88] sm:$0xff]
    %v180 = vld [vmem:[#allocation7 + $0x90] sm:$0xff]
    %v181 = vld [vmem:[#allocation7 + $0x98] sm:$0xff]
    %v182 = vld [vmem:[#allocation7 + $0xa0] sm:$0xff]
    %v183 = vld [vmem:[#allocation7 + $0xa8] sm:$0xff]
    %v184 = vld [vmem:[#allocation7 + $0xb0] sm:$0xff]
    %v185 = vld [vmem:[#allocation7 + $0xb8] sm:$0xff]
    %v186 = vld [vmem:[#allocation7 + $0xc0] sm:$0xff]
    %v187 = vld [vmem:[#allocation7 + $0xc8] sm:$0xff]
    %v188 = vld [vmem:[#allocation7 + $0xd0] sm:$0xff]
    %v189 = vld [vmem:[#allocation7 + $0xd8] sm:$0xff]
    %v190 = vld [vmem:[#allocation7 + $0xe0] sm:$0xff]
    %v191 = vld [vmem:[#allocation7 + $0xe8] sm:$0xff]
    %v192 = vld [vmem:[#allocation7 + $0xf0] sm:$0xff]
    %v193 = vld [vmem:[#allocation7 + $0xf8] sm:$0xff]
    %v194 = vld [vmem:[#allocation7 + $0x100] sm:$0xff]
    %v195 = vld [vmem:[#allocation7 + $0x108] sm:$0xff]
    %v196 = vld [vmem:[#allocation7 + $0x110] sm:$0xff]
    %v197 = vld [vmem:[#allocation7 + $0x118] sm:$0xff]
    %v198 = vld [vmem:[#allocation7 + $0x120] sm:$0xff]
    %v199 = vld [vmem:[#allocation7 + $0x128] sm:$0xff]
    %v200 = vld [vmem:[#allocation7 + $0x130] sm:$0xff]
    %v201 = vld [vmem:[#allocation7 + $0x138] sm:$0xff]
    %v202 = vld [vmem:[#allocation7 + $0x140] sm:$0xff]
    %v203 = vld [vmem:[#allocation7 + $0x148] sm:$0xff]
    %v204 = vld [vmem:[#allocation7 + $0x150] sm:$0xff]
    %v205 = vld [vmem:[#allocation7 + $0x158] sm:$0xff]
    %v206 = vld [vmem:[#allocation7 + $0x160] sm:$0xff]
    %v207 = vld [vmem:[#allocation7 + $0x168] sm:$0xff]
    %v208 = vld [vmem:[#allocation7 + $0x170] sm:$0xff]
    %v209 = vld [vmem:[#allocation7 + $0x178] sm:$0xff]
    %v210 = vld [vmem:[#allocation7 + $0x180] sm:$0xff]
    %v211 = vld [vmem:[#allocation7 + $0x188] sm:$0xff]
    %v212 = vld [vmem:[#allocation7 + $0x190] sm:$0xff]
    %v213 = vld [vmem:[#allocation7 + $0x198] sm:$0xff]
    %v214 = vld [vmem:[#allocation7 + $0x1a0] sm:$0xff]
    %v215 = vld [vmem:[#allocation7 + $0x1a8] sm:$0xff]
    %v216 = vld [vmem:[#allocation7 + $0x1b0] sm:$0xff]
    %v217 = vld [vmem:[#allocation7 + $0x1b8] sm:$0xff]
    %v218 = vld [vmem:[#allocation7 + $0x1c0] sm:$0xff]
    %v219 = vld [vmem:[#allocation7 + $0x1c8] sm:$0xff]
    %v220 = vld [vmem:[#allocation7 + $0x1d0] sm:$0xff]
    %v221 = vld [vmem:[#allocation7 + $0x1d8] sm:$0xff]
    %v222 = vld [vmem:[#allocation7 + $0x1e0] sm:$0xff]
    %v223 = vld [vmem:[#allocation7 + $0x1e8] sm:$0xff]
    %v224 = vld [vmem:[#allocation7 + $0x1f0] sm:$0xff]
    %v225 = vld [vmem:[#allocation7 + $0x1f8] sm:$0xff]
    %v226 = vld [vmem:[#allocation8] sm:$0xf]
    %v228 = vperm.slane %v226, 0
    %v229 = vperm.slane %v226, 1
    %v230 = vperm.slane %v226, 2
    %v231 = vperm.slane %v226, 3
    %236 = vmatpush.msra.mxu0 %v222
    %237 = vmatpush.msra.mxu0 %v218
    %238 = vmatpush.msra.mxu0 %v214
    %239 = vmatpush.msra.mxu0 %v210
    %240 = vmatpush.msra.mxu0 %v206
    %241 = vmatpush.msra.mxu0 %v202
    %242 = vmatpush.msra.mxu0 %v198
    %243 = vmatpush.msra.mxu0 %v194
    %244 = vmatpush.msra.mxu0 %v190
    %245 = vmatpush.msra.mxu0 %v186
    %246 = vmatpush.msra.mxu0 %v182
    %247 = vmatpush.msra.mxu0 %v178
    %248 = vmatpush.msra.mxu0 %v174
    %249 = vmatpush.msra.mxu0 %v170
    %250 = vmatpush.msra.mxu0 %v166
    %251 = vmatpush.msra.mxu0 %v162
    %252 = vmatmul.f32.gmra.mxu0 %v160
    %v253 = vpop.f32.mrf.mxu0
    %v254 = vadd.f32 %v228, %v253
    %255 = vmatmul.f32.gmra.mxu0 %v161
    %v256 = vpop.f32.mrf.mxu0
    %v257 = vadd.f32 %v228, %v256
    %258 = vdwg.mxu0
    %259 = vmatpush.msra.mxu0 %v223
    %260 = vmatpush.msra.mxu0 %v219
    %261 = vmatpush.msra.mxu0 %v215
    %262 = vmatpush.msra.mxu0 %v211
    %263 = vmatpush.msra.mxu0 %v207
    %264 = vmatpush.msra.mxu0 %v203
    %265 = vmatpush.msra.mxu0 %v199
    %266 = vmatpush.msra.mxu0 %v195
    %267 = vmatpush.msra.mxu0 %v191
    %268 = vmatpush.msra.mxu0 %v187
    %269 = vmatpush.msra.mxu0 %v183
    %270 = vmatpush.msra.mxu0 %v179
    %271 = vmatpush.msra.mxu0 %v175
    %272 = vmatpush.msra.mxu0 %v171
    %273 = vmatpush.msra.mxu0 %v167
    %274 = vmatpush.msra.mxu0 %v163
    %275 = vmatmul.f32.gmra.mxu0 %v160
    %v276 = vpop.f32.mrf.mxu0
    %v277 = vadd.f32 %v229, %v276
    %278 = vmatmul.f32.gmra.mxu0 %v161
    %v279 = vpop.f32.mrf.mxu0
    %v280 = vadd.f32 %v229, %v279
    %281 = vdwg.mxu0
    %282 = vmatpush.msra.mxu0 %v224
    %283 = vmatpush.msra.mxu0 %v220
    %284 = vmatpush.msra.mxu0 %v216
    %285 = vmatpush.msra.mxu0 %v212
    %286 = vmatpush.msra.mxu0 %v208
    %287 = vmatpush.msra.mxu0 %v204
    %288 = vmatpush.msra.mxu0 %v200
    %289 = vmatpush.msra.mxu0 %v196
    %290 = vmatpush.msra.mxu0 %v192
    %291 = vmatpush.msra.mxu0 %v188
    %292 = vmatpush.msra.mxu0 %v184
    %293 = vmatpush.msra.mxu0 %v180
    %294 = vmatpush.msra.mxu0 %v176
    %295 = vmatpush.msra.mxu0 %v172
    %296 = vmatpush.msra.mxu0 %v168
    %297 = vmatpush.msra.mxu0 %v164
    %298 = vmatmul.f32.gmra.mxu0 %v160
    %v299 = vpop.f32.mrf.mxu0
    %v300 = vadd.f32 %v230, %v299
    %301 = vmatmul.f32.gmra.mxu0 %v161
    %v302 = vpop.f32.mrf.mxu0
    %v303 = vadd.f32 %v230, %v302
    %304 = vdwg.mxu0
    %305 = vmatpush.msra.mxu0 %v225
    %306 = vmatpush.msra.mxu0 %v221
    %307 = vmatpush.msra.mxu0 %v217
    %308 = vmatpush.msra.mxu0 %v213
    %309 = vmatpush.msra.mxu0 %v209
    %310 = vmatpush.msra.mxu0 %v205
    %311 = vmatpush.msra.mxu0 %v201
    %312 = vmatpush.msra.mxu0 %v197
    %313 = vmatpush.msra.mxu0 %v193
    %314 = vmatpush.msra.mxu0 %v189
    %315 = vmatpush.msra.mxu0 %v185
    %316 = vmatpush.msra.mxu0 %v181
    %317 = vmatpush.msra.mxu0 %v177
    %318 = vmatpush.msra.mxu0 %v173
    %319 = vmatpush.msra.mxu0 %v169
    %320 = vmatpush.msra.mxu0 %v165
    %321 = vmatmul.f32.gmra.mxu0 %v160
    %v322 = vpop.f32.mrf.mxu0
    %v323 = vadd.f32 %v231, %v322
    %324 = vmatmul.f32.gmra.mxu0 %v161
    %v325 = vpop.f32.mrf.mxu0
    %v326 = vadd.f32 %v231, %v325
    %327 = vdwg.mxu0
    %v328 = vmax.f32 %v254, 0.0
    %v329 = vmax.f32 %v277, 0.0
    %v330 = vmax.f32 %v300, 0.0
    %v331 = vmax.f32 %v323, 0.0
    %v332 = vmax.f32 %v257, 0.0
    %v333 = vmax.f32 %v280, 0.0
    %v334 = vmax.f32 %v303, 0.0
    %v335 = vmax.f32 %v326, 0.0
    %v336 = vld [vmem:[#allocation10] sm:$0xff]
    %v337 = vld [vmem:[#allocation10 + $0x8] sm:$0xff]
    %v338 = vld [vmem:[#allocation10 + $0x10] sm:$0xff]
    %v339 = vld [vmem:[#allocation10 + $0x18] sm:$0xff]
    %v340 = vld [vmem:[#allocation10 + $0x20] sm:$0xff]
    %v341 = vld [vmem:[#allocation10 + $0x28] sm:$0xff]
    %v342 = vld [vmem:[#allocation10 + $0x30] sm:$0xff]
    %v343 = vld [vmem:[#allocation10 + $0x38] sm:$0xff]
    %v344 = vld [vmem:[#allocation10 + $0x40] sm:$0xff]
    %v345 = vld [vmem:[#allocation10 + $0x48] sm:$0xff]
    %v346 = vld [vmem:[#allocation10 + $0x50] sm:$0xff]
    %v347 = vld [vmem:[#allocation10 + $0x58] sm:$0xff]
    %v348 = vld [vmem:[#allocation10 + $0x60] sm:$0xff]
    %v349 = vld [vmem:[#allocation10 + $0x68] sm:$0xff]
    %v350 = vld [vmem:[#allocation10 + $0x70] sm:$0xff]
    %v351 = vld [vmem:[#allocation10 + $0x78] sm:$0xff]
    %v352 = vld [vmem:[#allocation10 + $0x80] sm:$0xff]
    %v353 = vld [vmem:[#allocation10 + $0x88] sm:$0xff]
    %v354 = vld [vmem:[#allocation10 + $0x90] sm:$0xff]
    %v355 = vld [vmem:[#allocation10 + $0x98] sm:$0xff]
    %v356 = vld [vmem:[#allocation10 + $0xa0] sm:$0xff]
    %v357 = vld [vmem:[#allocation10 + $0xa8] sm:$0xff]
    %v358 = vld [vmem:[#allocation10 + $0xb0] sm:$0xff]
    %v359 = vld [vmem:[#allocation10 + $0xb8] sm:$0xff]
    %v360 = vld [vmem:[#allocation10 + $0xc0] sm:$0xff]
    %v361 = vld [vmem:[#allocation10 + $0xc8] sm:$0xff]
    %v362 = vld [vmem:[#allocation10 + $0xd0] sm:$0xff]
    %v363 = vld [vmem:[#allocation10 + $0xd8] sm:$0xff]
    %v364 = vld [vmem:[#allocation10 + $0xe0] sm:$0xff]
    %v365 = vld [vmem:[#allocation10 + $0xe8] sm:$0xff]
    %v366 = vld [vmem:[#allocation10 + $0xf0] sm:$0xff]
    %v367 = vld [vmem:[#allocation10 + $0xf8] sm:$0xff]
    %v368 = vld [vmem:[#allocation10 + $0x100] sm:$0xff]
    %v369 = vld [vmem:[#allocation10 + $0x108] sm:$0xff]
    %v370 = vld [vmem:[#allocation10 + $0x110] sm:$0xff]
    %v371 = vld [vmem:[#allocation10 + $0x118] sm:$0xff]
    %v372 = vld [vmem:[#allocation10 + $0x120] sm:$0xff]
    %v373 = vld [vmem:[#allocation10 + $0x128] sm:$0xff]
    %v374 = vld [vmem:[#allocation10 + $0x130] sm:$0xff]
    %v375 = vld [vmem:[#allocation10 + $0x138] sm:$0xff]
    %v376 = vld [vmem:[#allocation10 + $0x140] sm:$0xff]
    %v377 = vld [vmem:[#allocation10 + $0x148] sm:$0xff]
    %v378 = vld [vmem:[#allocation10 + $0x150] sm:$0xff]
    %v379 = vld [vmem:[#allocation10 + $0x158] sm:$0xff]
    %v380 = vld [vmem:[#allocation10 + $0x160] sm:$0xff]
    %v381 = vld [vmem:[#allocation10 + $0x168] sm:$0xff]
    %v382 = vld [vmem:[#allocation10 + $0x170] sm:$0xff]
    %v383 = vld [vmem:[#allocation10 + $0x178] sm:$0xff]
    %v384 = vld [vmem:[#allocation10 + $0x180] sm:$0xff]
    %v385 = vld [vmem:[#allocation10 + $0x188] sm:$0xff]
    %v386 = vld [vmem:[#allocation10 + $0x190] sm:$0xff]
    %v387 = vld [vmem:[#allocation10 + $0x198] sm:$0xff]
    %v388 = vld [vmem:[#allocation10 + $0x1a0] sm:$0xff]
    %v389 = vld [vmem:[#allocation10 + $0x1a8] sm:$0xff]
    %v390 = vld [vmem:[#allocation10 + $0x1b0] sm:$0xff]
    %v391 = vld [vmem:[#allocation10 + $0x1b8] sm:$0xff]
    %v392 = vld [vmem:[#allocation10 + $0x1c0] sm:$0xff]
    %v393 = vld [vmem:[#allocation10 + $0x1c8] sm:$0xff]
    %v394 = vld [vmem:[#allocation10 + $0x1d0] sm:$0xff]
    %v395 = vld [vmem:[#allocation10 + $0x1d8] sm:$0xff]
    %v396 = vld [vmem:[#allocation10 + $0x1e0] sm:$0xff]
    %v397 = vld [vmem:[#allocation10 + $0x1e8] sm:$0xff]
    %v398 = vld [vmem:[#allocation10 + $0x1f0] sm:$0xff]
    %v399 = vld [vmem:[#allocation10 + $0x1f8] sm:$0xff]
    %v400 = vld [vmem:[%s6] sm:$0x1]
    %v402 = vperm.slane %v400, 0
    %404 = vmatpush.msra.mxu0 %v351
    %405 = vmatpush.msra.mxu0 %v350
    %406 = vmatpush.msra.mxu0 %v349
    %407 = vmatpush.msra.mxu0 %v348
    %408 = vmatpush.msra.mxu0 %v347
    %409 = vmatpush.msra.mxu0 %v346
    %410 = vmatpush.msra.mxu0 %v345
    %411 = vmatpush.msra.mxu0 %v344
    %412 = vmatpush.msra.mxu0 %v343
    %413 = vmatpush.msra.mxu0 %v342
    %414 = vmatpush.msra.mxu0 %v341
    %415 = vmatpush.msra.mxu0 %v340
    %416 = vmatpush.msra.mxu0 %v339
    %417 = vmatpush.msra.mxu0 %v338
    %418 = vmatpush.msra.mxu0 %v337
    %419 = vmatpush.msra.mxu0 %v336
    %420 = vmatmul.f32.gmra.mxu0 %v328
    %v421 = vpop.f32.mrf.mxu0
    %v422 = vadd.f32 %v402, %v421
    %423 = vmatmul.f32.gmra.mxu0 %v332
    %v424 = vpop.f32.mrf.mxu0
    %v425 = vadd.f32 %v402, %v424
    %426 = vdwg.mxu0
    %427 = vmatpush.msra.mxu0 %v367
    %428 = vmatpush.msra.mxu0 %v366
    %429 = vmatpush.msra.mxu0 %v365
    %430 = vmatpush.msra.mxu0 %v364
    %431 = vmatpush.msra.mxu0 %v363
    %432 = vmatpush.msra.mxu0 %v362
    %433 = vmatpush.msra.mxu0 %v361
    %434 = vmatpush.msra.mxu0 %v360
    %435 = vmatpush.msra.mxu0 %v359
    %436 = vmatpush.msra.mxu0 %v358
    %437 = vmatpush.msra.mxu0 %v357
    %438 = vmatpush.msra.mxu0 %v356
    %439 = vmatpush.msra.mxu0 %v355
    %440 = vmatpush.msra.mxu0 %v354
    %441 = vmatpush.msra.mxu0 %v353
    %442 = vmatpush.msra.mxu0 %v352
    %443 = vmatmul.f32.gmra.mxu0 %v329
    %v444 = vpop.f32.mrf.mxu0
    %v445 = vadd.f32 %v422, %v444
    %446 = vmatmul.f32.gmra.mxu0 %v333
    %v447 = vpop.f32.mrf.mxu0
    %v448 = vadd.f32 %v425, %v447
    %449 = vdwg.mxu0
    %450 = vmatpush.msra.mxu0 %v383
    %451 = vmatpush.msra.mxu0 %v382
    %452 = vmatpush.msra.mxu0 %v381
    %453 = vmatpush.msra.mxu0 %v380
    %454 = vmatpush.msra.mxu0 %v379
    %455 = vmatpush.msra.mxu0 %v378
    %456 = vmatpush.msra.mxu0 %v377
    %457 = vmatpush.msra.mxu0 %v376
    %458 = vmatpush.msra.mxu0 %v375
    %459 = vmatpush.msra.mxu0 %v374
    %460 = vmatpush.msra.mxu0 %v373
    %461 = vmatpush.msra.mxu0 %v372
    %462 = vmatpush.msra.mxu0 %v371
    %463 = vmatpush.msra.mxu0 %v370
    %464 = vmatpush.msra.mxu0 %v369
    %465 = vmatpush.msra.mxu0 %v368
    %466 = vmatmul.f32.gmra.mxu0 %v330
    %v467 = vpop.f32.mrf.mxu0
    %v468 = vadd.f32 %v445, %v467
    %469 = vmatmul.f32.gmra.mxu0 %v334
    %v470 = vpop.f32.mrf.mxu0
    %v471 = vadd.f32 %v448, %v470
    %472 = vdwg.mxu0
    %473 = vmatpush.msra.mxu0 %v399
    %474 = vmatpush.msra.mxu0 %v398
    %475 = vmatpush.msra.mxu0 %v397
    %476 = vmatpush.msra.mxu0 %v396
    %477 = vmatpush.msra.mxu0 %v395
    %478 = vmatpush.msra.mxu0 %v394
    %479 = vmatpush.msra.mxu0 %v393
    %480 = vmatpush.msra.mxu0 %v392
    %481 = vmatpush.msra.mxu0 %v391
    %482 = vmatpush.msra.mxu0 %v390
    %483 = vmatpush.msra.mxu0 %v389
    %484 = vmatpush.msra.mxu0 %v388
    %485 = vmatpush.msra.mxu0 %v387
    %486 = vmatpush.msra.mxu0 %v386
    %487 = vmatpush.msra.mxu0 %v385
    %488 = vmatpush.msra.mxu0 %v384
    %489 = vmatmul.f32.gmra.mxu0 %v331
    %v490 = vpop.f32.mrf.mxu0
    %v491 = vadd.f32 %v468, %v490
    %492 = vmatmul.f32.gmra.mxu0 %v335
    %v493 = vpop.f32.mrf.mxu0
    %v494 = vadd.f32 %v471, %v493
    %495 = vdwg.mxu0
    %496 = vst [vmem:[#allocation11] sm:$0xff] %v491
    %497 = vst [vmem:[#allocation11 + $0x8] sm:$0xff] %v494
    // Predicated region
    $region50: #{tpu_custom_call.1} parent=1 // pred_check
      _
    $region51: #{tpu_custom_call.1} parent=1 // pred_check_branch
      %499 = sbr.rel (0) target = $region53
    $region52: #{tpu_custom_call.1} parent=1 // pred_region
      %501 = vsyncadd [#allocation4], 0
      %s502 = sshll.u32 [#allocation11], 4
      %s503 = int_to_ptr.vmem [resolvable:$true] %s502
      %s504 = sshll.u32 %s7, 4
      %s505 = int_to_ptr.hbm [resolvable:$true] %s504
      %510 = dma.vmem_to_hbm [thread:$0]  %s503, 256, %s505, [#allocation4], 128, 128, 8
    $region53: #{tpu_custom_call.1} parent=1 // pred_fallthru
      _
    // Predicated region
    $region54: #{tpu_custom_call.1} parent=1 // pred_check
      _
    $region55: #{tpu_custom_call.1} parent=1 // pred_check_branch
      %512 = sbr.rel (0) target = $region57
    $region56: #{tpu_custom_call.1} parent=1 // pred_region
      %514 = dma.done [#allocation4], 256
    $region57: #{tpu_custom_call.1} parent=1 // pred_fallthru
      _
    %515 = vsyncpa [#allocation3], 1
    %516 = vsyncpa [#allocation6], 1
    %517 = vsyncpa [#allocation9], 1
    %518 = vsyncpa [#allocation4], 1

// kernel: tpu_custom_call.1
$region0: #{tpu_custom_call.1}
  #allocation0 [shape = 'u32[]', space=smem, size = 0x4, offset = 0x4, fixed_abs, tag = 'smem constant byte address 0x4 - core index']
  #allocation1 [shape = 'u32[72,128]{1,0:T(1,128)}', space=vmem, size = 0x9000, scoped, tag = 'internal scratch']
  %s0 = inlined_call_operand.hbm [shape: f32[16,128], index: 0, kind: input, shape index: {}]
  %s1 = inlined_call_operand.hbm [shape: f32[1,128], index: 1, kind: input, shape index: {}]
  %s2 = inlined_call_operand.vmem [shape: f32[1,128], index: 2, kind: input, shape index: {}]
  %s3 = inlined_call_operand.hbm [shape: f32[128,512], index: 3, kind: input, shape index: {}]
  %s4 = inlined_call_operand.hbm [shape: f32[1,512], index: 4, kind: input, shape index: {}]
  %s5 = inlined_call_operand.hbm [shape: f32[512,128], index: 5, kind: input, shape index: {}]
  %s6 = inlined_call_operand.vmem [shape: f32[1,128], index: 6, kind: input, shape index: {}]
  %s7 = inlined_call_operand.hbm [shape: f32[16,128], index: 7, kind: output, shape index: {}]
  %s8 = sld [smem:[#allocation0]]
  $region58: #{tpu_custom_call.1} parent=0
    _
  %s10 = ssub.s32 1, %s8
  %s11 = scalar_select 0, %s10, %s8
  $region1: #{tpu_custom_call.1} parent=0
    #allocation2 [shape = 'u8[8192]{0}', space=vmem, size = 0x2000, scoped, tag = 'input window, operand 0, single buffered']
    #allocation3 [shape = 's32[1]{0}', space=sflag, size = 0x4, scoped, tag = 'scoped memory for tpu_custom_call.1']
    #allocation4 [shape = 's32[1]{0}', space=sflag, size = 0x4, scoped, tag = 'scoped memory for tpu_custom_call.1']
    #allocation5 [shape = 'u8[512]{0}', space=vmem, size = 0x400, scoped, tag = 'input window, operand 1, single buffered']
    #allocation6 [shape = 's32[1]{0}', space=sflag, size = 0x4, scoped, tag = 'scoped memory for tpu_custom_call.1']
    #allocation7 [shape = 'u8[262144]{0}', space=vmem, size = 0x40000, scoped, tag = 'input window, operand 3, single buffered']
    #allocation8 [shape = 'u8[2048]{0}', space=vmem, size = 0x800, scoped, tag = 'input window, operand 4, single buffered']
    #allocation9 [shape = 's32[1]{0}', space=sflag, size = 0x4, scoped, tag = 'scoped memory for tpu_custom_call.1']
    #allocation10 [shape = 'u8[262144]{0}', space=vmem, size = 0x40000, scoped, tag = 'input window, operand 5, single buffered']
    #allocation11 [shape = 'u8[8192]{0}', space=vmem, size = 0x2000, scoped, tag = 'output window, operand 0, single buffered']
    %12 = vsyncpa [#allocation3], 0
    %13 = vsyncpa [#allocation6], 0
    %14 = vsyncpa [#allocation9], 0
    %15 = vsyncpa [#allocation4], 0
    // Predicated region
    $region2: #{tpu_custom_call.1} parent=1 // pred_check
      _
    $region3: #{tpu_custom_call.1} parent=1 // pred_check_branch
      %17 = sbr.rel (0) target = $region5
    $region4: #{tpu_custom_call.1} parent=1 // pred_region
      %19 = vsyncadd [#allocation3], 0
      %s20 = sshll.u32 %s0, 4
      %s21 = int_to_ptr.hbm [resolvable:$true] %s20
      %s22 = sshll.u32 [#allocation2], 4
      %s23 = int_to_ptr.vmem [resolvable:$true] %s22
      %28 = dma.hbm_to_vmem [thread:$0]  %s21, 256, %s23, [#allocation3], 128, 128, 8
    $region5: #{tpu_custom_call.1} parent=1 // pred_fallthru
      _
    // Predicated region
    $region6: #{tpu_custom_call.1} parent=1 // pred_check
      _
    $region7: #{tpu_custom_call.1} parent=1 // pred_check_branch
      %30 = sbr.rel (0) target = $region9
    $region8: #{tpu_custom_call.1} parent=1 // pred_region
      %32 = vsyncadd [#allocation6], 0
      %s34 = sshll.u32 %s1, 4
      %s35 = int_to_ptr.hbm [resolvable:$true] %s34
      %s36 = sshll.u32 [#allocation5], 4
      %s37 = int_to_ptr.vmem [resolvable:$true] %s36
      %39 = dma.hbm_to_vmem [thread:$0]  %s35, 16, %s37, [#allocation6]
    $region9: #{tpu_custom_call.1} parent=1 // pred_fallthru
      _
    // Predicated region
    $region10: #{tpu_custom_call.1} parent=1 // pred_check
      _
    $region11: #{tpu_custom_call.1} parent=1 // pred_check_branch
      %41 = sbr.rel (0) target = $region13
    $region12: #{tpu_custom_call.1} parent=1 // pred_region
      _
    $region13: #{tpu_custom_call.1} parent=1 // pred_fallthru
      _
    // Predicated region
    $region14: #{tpu_custom_call.1} parent=1 // pred_check
      _
    $region15: #{tpu_custom_call.1} parent=1 // pred_check_branch
      %43 = sbr.rel (0) target = $region17
    $region16: #{tpu_custom_call.1} parent=1 // pred_region
      %45 = vsyncadd [#allocation6], 0
      %s46 = sshll.u32 %s3, 4
      %s47 = int_to_ptr.hbm [resolvable:$true] %s46
      %s48 = sshll.u32 [#allocation7], 4
      %s49 = int_to_ptr.vmem [resolvable:$true] %s48
      %54 = dma.hbm_to_vmem [thread:$0]  %s47, 8192, %s49, [#allocation6], 512, 512, 32
    $region17: #{tpu_custom_call.1} parent=1 // pred_fallthru
      _
    // Predicated region
    $region18: #{tpu_custom_call.1} parent=1 // pred_check
      _
    $region19: #{tpu_custom_call.1} parent=1 // pred_check_branch
      %56 = sbr.rel (0) target = $region21
    $region20: #{tpu_custom_call.1} parent=1 // pred_region
      %58 = vsyncadd [#allocation9], 0
      %s60 = sshll.u32 %s4, 4
      %s61 = int_to_ptr.hbm [resolvable:$true] %s60
      %s62 = sshll.u32 [#allocation8], 4
      %s63 = int_to_ptr.vmem [resolvable:$true] %s62
      %65 = dma.hbm_to_vmem [thread:$0]  %s61, 64, %s63, [#allocation9]
    $region21: #{tpu_custom_call.1} parent=1 // pred_fallthru
      _
    // Predicated region
    $region22: #{tpu_custom_call.1} parent=1 // pred_check
      _
    $region23: #{tpu_custom_call.1} parent=1 // pred_check_branch
      %67 = sbr.rel (0) target = $region25
    $region24: #{tpu_custom_call.1} parent=1 // pred_region
      %69 = vsyncadd [#allocation9], 0
      %s70 = sshll.u32 %s5, 4
      %s71 = int_to_ptr.hbm [resolvable:$true] %s70
      %s72 = sshll.u32 [#allocation10], 4
      %s73 = int_to_ptr.vmem [resolvable:$true] %s72
      %78 = dma.hbm_to_vmem [thread:$0]  %s71, 8192, %s73, [#allocation9], 128, 128, 8
    $region25: #{tpu_custom_call.1} parent=1 // pred_fallthru
      _
    // Predicated region
    $region26: #{tpu_custom_call.1} parent=1 // pred_check
      _
    $region27: #{tpu_custom_call.1} parent=1 // pred_check_branch
      %80 = sbr.rel (0) target = $region29
    $region28: #{tpu_custom_call.1} parent=1 // pred_region
      _
    $region29: #{tpu_custom_call.1} parent=1 // pred_fallthru
      _
    // Predicated region
    $region30: #{tpu_custom_call.1} parent=1 // pred_check
      _
    $region31: #{tpu_custom_call.1} parent=1 // pred_check_branch
      %82 = sbr.rel (0) target = $region33
    $region32: #{tpu_custom_call.1} parent=1 // pred_region
      %84 = dma.done [#allocation3], 256
    $region33: #{tpu_custom_call.1} parent=1 // pred_fallthru
      _
    // Predicated region
    $region34: #{tpu_custom_call.1} parent=1 // pred_check
      _
    $region35: #{tpu_custom_call.1} parent=1 // pred_check_branch
      %86 = sbr.rel (0) target = $region37
    $region36: #{tpu_custom_call.1} parent=1 // pred_region
      %88 = dma.done [#allocation6], 16
    $region37: #{tpu_custom_call.1} parent=1 // pred_fallthru
      _
    // Predicated region
    $region38: #{tpu_custom_call.1} parent=1 // pred_check
      _
    $region39: #{tpu_custom_call.1} parent=1 // pred_check_branch
      %90 = sbr.rel (0) target = $region41
    $region40: #{tpu_custom_call.1} parent=1 // pred_region
      %92 = dma.done [#allocation6], 8192
    $region41: #{tpu_custom_call.1} parent=1 // pred_fallthru
      _
    // Predicated region
    $region42: #{tpu_custom_call.1} parent=1 // pred_check
      _
    $region43: #{tpu_custom_call.1} parent=1 // pred_check_branch
      %94 = sbr.rel (0) target = $region45
    $region44: #{tpu_custom_call.1} parent=1 // pred_region
      %96 = dma.done [#allocation9], 64
    $region45: #{tpu_custom_call.1} parent=1 // pred_fallthru
      _
    // Predicated region
    $region46: #{tpu_custom_call.1} parent=1 // pred_check
      _
    $region47: #{tpu_custom_call.1} parent=1 // pred_check_branch
      %98 = sbr.rel (0) target = $region49
    $region48: #{tpu_custom_call.1} parent=1 // pred_region
      %100 = dma.done [#allocation9], 8192
    $region49: #{tpu_custom_call.1} parent=1 // pred_fallthru
      _
    %v101 = vld [vmem:[#allocation2] sm:$0xff]
    %v102 = vld [vmem:[#allocation2 + $0x8] sm:$0xff]
    %103 = vadd.xlane.f32.xlu0 %v101
    %v104 = vpop.xlane.xlu0 %103
    %105 = vadd.xlane.f32.xlu0 %v102
    %v106 = vpop.xlane.xlu0 %105
    %v107 = vrcp.pop 128.0
    %v108 = vmul.f32 128.0, %v107
    %v109 = vsub.f32 1.0, %v108
    %v110 = vmul.f32 %v107, %v109
    %v111 = vadd.f32 %v107, %v110
    %vm112 = vweird.f32 %v107
    %v113 = vsel %vm112, %v107, %v111
    %v114 = vmul.f32 %v104, %v113
    %v115 = vmul.f32 %v106, %v113
    %v116 = vsub.f32 %v101, %v114
    %v117 = vsub.f32 %v102, %v115
    %v118 = vmul.f32 %v116, %v116
    %v119 = vmul.f32 %v117, %v117
    %120 = vadd.xlane.f32.xlu0 %v118
    %v121 = vpop.xlane.xlu0 %120
    %122 = vadd.xlane.f32.xlu0 %v119
    %v123 = vpop.xlane.xlu0 %122
    %v124 = vmul.f32 %v121, %v113
    %v125 = vmul.f32 %v123, %v113
    %v126 = vadd.f32 %v124, 1e-05
    %v127 = vadd.f32 %v125, 1e-05
    %v128 = vrsqrt.pop %v126
    %v129 = vmul.f32 %v128, %v126
    %v130 = vmul.f32 %v129, %v128
    %v131 = vmul.f32 0.5, %v130
    %v132 = vsub.f32 1.5, %v131
    %v133 = vmul.f32 %v128, %v132
    %vm134 = vweird.f32 %v126
    %vm135 = vweird.f32 %v128
    %vm136 = vmor %vm134, %vm135
    %v137 = vsel %vm136, %v128, %v133
    %v138 = vrsqrt.pop %v127
    %v139 = vmul.f32 %v138, %v127
    %v140 = vmul.f32 %v139, %v138
    %v141 = vmul.f32 0.5, %v140
    %v142 = vsub.f32 1.5, %v141
    %v143 = vmul.f32 %v138, %v142
    %vm144 = vweird.f32 %v127
    %vm145 = vweird.f32 %v138
    %vm146 = vmor %vm144, %vm145
    %v147 = vsel %vm146, %v138, %v143
    %v148 = vmul.f32 %v116, %v137
    %v149 = vmul.f32 %v117, %v147
    %v150 = vld [vmem:[#allocation5] sm:$0x1]
    %v152 = vperm.slane %v150, 0
    %v154 = vmul.f32 %v148, %v152
    %v155 = vmul.f32 %v149, %v152
    %v156 = vld [vmem:[%s2] sm:$0x1]
    %v158 = vperm.slane %v156, 0
    %v160 = vadd.f32 %v154, %v158
    %v161 = vadd.f32 %v155, %v158
    %v162 = vld [vmem:[#allocation7] sm:$0xff]
    %v163 = vld [vmem:[#allocation7 + $0x8] sm:$0xff]
    %v164 = vld [vmem:[#allocation7 + $0x10] sm:$0xff]
    %v165 = vld [vmem:[#allocation7 + $0x18] sm:$0xff]
    %v166 = vld [vmem:[#allocation7 + $0x20] sm:$0xff]
    %v167 = vld [vmem:[#allocation7 + $0x28] sm:$0xff]
    %v168 = vld [vmem:[#allocation7 + $0x30] sm:$0xff]
    %v169 = vld [vmem:[#allocation7 + $0x38] sm:$0xff]
    %v170 = vld [vmem:[#allocation7 + $0x40] sm:$0xff]
    %v171 = vld [vmem:[#allocation7 + $0x48] sm:$0xff]
    %v172 = vld [vmem:[#allocation7 + $0x50] sm:$0xff]
    %v173 = vld [vmem:[#allocation7 + $0x58] sm:$0xff]
    %v174 = vld [vmem:[#allocation7 + $0x60] sm:$0xff]
    %v175 = vld [vmem:[#allocation7 + $0x68] sm:$0xff]
    %v176 = vld [vmem:[#allocation7 + $0x70] sm:$0xff]
    %v177 = vld [vmem:[#allocation7 + $0x78] sm:$0xff]
    %v178 = vld [vmem:[#allocation7 + $0x80] sm:$0xff]
    %v179 = vld [vmem:[#allocation7 + $0x88] sm:$0xff]
    %v180 = vld [vmem:[#allocation7 + $0x90] sm:$0xff]
    %v181 = vld [vmem:[#allocation7 + $0x98] sm:$0xff]
    %v182 = vld [vmem:[#allocation7 + $0xa0] sm:$0xff]
    %v183 = vld [vmem:[#allocation7 + $0xa8] sm:$0xff]
    %v184 = vld [vmem:[#allocation7 + $0xb0] sm:$0xff]
    %v185 = vld [vmem:[#allocation7 + $0xb8] sm:$0xff]
    %v186 = vld [vmem:[#allocation7 + $0xc0] sm:$0xff]
    %v187 = vld [vmem:[#allocation7 + $0xc8] sm:$0xff]
    %v188 = vld [vmem:[#allocation7 + $0xd0] sm:$0xff]
    %v189 = vld [vmem:[#allocation7 + $0xd8] sm:$0xff]
    %v190 = vld [vmem:[#allocation7 + $0xe0] sm:$0xff]
    %v191 = vld [vmem:[#allocation7 + $0xe8] sm:$0xff]
    %v192 = vld [vmem:[#allocation7 + $0xf0] sm:$0xff]
    %v193 = vld [vmem:[#allocation7 + $0xf8] sm:$0xff]
    %v194 = vld [vmem:[#allocation7 + $0x100] sm:$0xff]
    %v195 = vld [vmem:[#allocation7 + $0x108] sm:$0xff]
    %v196 = vld [vmem:[#allocation7 + $0x110] sm:$0xff]
    %v197 = vld [vmem:[#allocation7 + $0x118] sm:$0xff]
    %v198 = vld [vmem:[#allocation7 + $0x120] sm:$0xff]
    %v199 = vld [vmem:[#allocation7 + $0x128] sm:$0xff]
    %v200 = vld [vmem:[#allocation7 + $0x130] sm:$0xff]
    %v201 = vld [vmem:[#allocation7 + $0x138] sm:$0xff]
    %v202 = vld [vmem:[#allocation7 + $0x140] sm:$0xff]
    %v203 = vld [vmem:[#allocation7 + $0x148] sm:$0xff]
    %v204 = vld [vmem:[#allocation7 + $0x150] sm:$0xff]
    %v205 = vld [vmem:[#allocation7 + $0x158] sm:$0xff]
    %v206 = vld [vmem:[#allocation7 + $0x160] sm:$0xff]
    %v207 = vld [vmem:[#allocation7 + $0x168] sm:$0xff]
    %v208 = vld [vmem:[#allocation7 + $0x170] sm:$0xff]
    %v209 = vld [vmem:[#allocation7 + $0x178] sm:$0xff]
    %v210 = vld [vmem:[#allocation7 + $0x180] sm:$0xff]
    %v211 = vld [vmem:[#allocation7 + $0x188] sm:$0xff]
    %v212 = vld [vmem:[#allocation7 + $0x190] sm:$0xff]
    %v213 = vld [vmem:[#allocation7 + $0x198] sm:$0xff]
    %v214 = vld [vmem:[#allocation7 + $0x1a0] sm:$0xff]
    %v215 = vld [vmem:[#allocation7 + $0x1a8] sm:$0xff]
    %v216 = vld [vmem:[#allocation7 + $0x1b0] sm:$0xff]
    %v217 = vld [vmem:[#allocation7 + $0x1b8] sm:$0xff]
    %v218 = vld [vmem:[#allocation7 + $0x1c0] sm:$0xff]
    %v219 = vld [vmem:[#allocation7 + $0x1c8] sm:$0xff]
    %v220 = vld [vmem:[#allocation7 + $0x1d0] sm:$0xff]
    %v221 = vld [vmem:[#allocation7 + $0x1d8] sm:$0xff]
    %v222 = vld [vmem:[#allocation7 + $0x1e0] sm:$0xff]
    %v223 = vld [vmem:[#allocation7 + $0x1e8] sm:$0xff]
    %v224 = vld [vmem:[#allocation7 + $0x1f0] sm:$0xff]
    %v225 = vld [vmem:[#allocation7 + $0x1f8] sm:$0xff]
    %v226 = vld [vmem:[#allocation8] sm:$0xf]
    %v228 = vperm.slane %v226, 0
    %v229 = vperm.slane %v226, 1
    %v230 = vperm.slane %v226, 2
    %v231 = vperm.slane %v226, 3
    %236 = vmatpush.msra.mxu0 %v222
    %237 = vmatpush.msra.mxu0 %v218
    %238 = vmatpush.msra.mxu0 %v214
    %239 = vmatpush.msra.mxu0 %v210
    %240 = vmatpush.msra.mxu0 %v206
    %241 = vmatpush.msra.mxu0 %v202
    %242 = vmatpush.msra.mxu0 %v198
    %243 = vmatpush.msra.mxu0 %v194
    %244 = vmatpush.msra.mxu0 %v190
    %245 = vmatpush.msra.mxu0 %v186
    %246 = vmatpush.msra.mxu0 %v182
    %247 = vmatpush.msra.mxu0 %v178
    %248 = vmatpush.msra.mxu0 %v174
    %249 = vmatpush.msra.mxu0 %v170
    %250 = vmatpush.msra.mxu0 %v166
    %251 = vmatpush.msra.mxu0 %v162
    %252 = vmatmul.f32.gmra.mxu0 %v160
    %v253 = vpop.f32.mrf.mxu0
    %v254 = vadd.f32 %v228, %v253
    %255 = vmatmul.f32.gmra.mxu0 %v161
    %v256 = vpop.f32.mrf.mxu0
    %v257 = vadd.f32 %v228, %v256
    %258 = vdwg.mxu0
    %259 = vmatpush.msra.mxu0 %v223
    %260 = vmatpush.msra.mxu0 %v219
    %261 = vmatpush.msra.mxu0 %v215
    %262 = vmatpush.msra.mxu0 %v211
    %263 = vmatpush.msra.mxu0 %v207
    %264 = vmatpush.msra.mxu0 %v203
    %265 = vmatpush.msra.mxu0 %v199
    %266 = vmatpush.msra.mxu0 %v195
    %267 = vmatpush.msra.mxu0 %v191
    %268 = vmatpush.msra.mxu0 %v187
    %269 = vmatpush.msra.mxu0 %v183
    %270 = vmatpush.msra.mxu0 %v179
    %271 = vmatpush.msra.mxu0 %v175
    %272 = vmatpush.msra.mxu0 %v171
    %273 = vmatpush.msra.mxu0 %v167
    %274 = vmatpush.msra.mxu0 %v163
    %275 = vmatmul.f32.gmra.mxu0 %v160
    %v276 = vpop.f32.mrf.mxu0
    %v277 = vadd.f32 %v229, %v276
    %278 = vmatmul.f32.gmra.mxu0 %v161
    %v279 = vpop.f32.mrf.mxu0
    %v280 = vadd.f32 %v229, %v279
    %281 = vdwg.mxu0
    %282 = vmatpush.msra.mxu0 %v224
    %283 = vmatpush.msra.mxu0 %v220
    %284 = vmatpush.msra.mxu0 %v216
    %285 = vmatpush.msra.mxu0 %v212
    %286 = vmatpush.msra.mxu0 %v208
    %287 = vmatpush.msra.mxu0 %v204
    %288 = vmatpush.msra.mxu0 %v200
    %289 = vmatpush.msra.mxu0 %v196
    %290 = vmatpush.msra.mxu0 %v192
    %291 = vmatpush.msra.mxu0 %v188
    %292 = vmatpush.msra.mxu0 %v184
    %293 = vmatpush.msra.mxu0 %v180
    %294 = vmatpush.msra.mxu0 %v176
    %295 = vmatpush.msra.mxu0 %v172
    %296 = vmatpush.msra.mxu0 %v168
    %297 = vmatpush.msra.mxu0 %v164
    %298 = vmatmul.f32.gmra.mxu0 %v160
    %v299 = vpop.f32.mrf.mxu0
    %v300 = vadd.f32 %v230, %v299
    %301 = vmatmul.f32.gmra.mxu0 %v161
    %v302 = vpop.f32.mrf.mxu0
    %v303 = vadd.f32 %v230, %v302
    %304 = vdwg.mxu0
    %305 = vmatpush.msra.mxu0 %v225
    %306 = vmatpush.msra.mxu0 %v221
    %307 = vmatpush.msra.mxu0 %v217
    %308 = vmatpush.msra.mxu0 %v213
    %309 = vmatpush.msra.mxu0 %v209
    %310 = vmatpush.msra.mxu0 %v205
    %311 = vmatpush.msra.mxu0 %v201
    %312 = vmatpush.msra.mxu0 %v197
    %313 = vmatpush.msra.mxu0 %v193
    %314 = vmatpush.msra.mxu0 %v189
    %315 = vmatpush.msra.mxu0 %v185
    %316 = vmatpush.msra.mxu0 %v181
    %317 = vmatpush.msra.mxu0 %v177
    %318 = vmatpush.msra.mxu0 %v173
    %319 = vmatpush.msra.mxu0 %v169
    %320 = vmatpush.msra.mxu0 %v165
    %321 = vmatmul.f32.gmra.mxu0 %v160
    %v322 = vpop.f32.mrf.mxu0
    %v323 = vadd.f32 %v231, %v322
    %324 = vmatmul.f32.gmra.mxu0 %v161
    %v325 = vpop.f32.mrf.mxu0
    %v326 = vadd.f32 %v231, %v325
    %327 = vdwg.mxu0
    %v328 = vmax.f32 %v254, 0.0
    %v329 = vmax.f32 %v277, 0.0
    %v330 = vmax.f32 %v300, 0.0
    %v331 = vmax.f32 %v323, 0.0
    %v332 = vmax.f32 %v257, 0.0
    %v333 = vmax.f32 %v280, 0.0
    %v334 = vmax.f32 %v303, 0.0
    %v335 = vmax.f32 %v326, 0.0
    %v336 = vld [vmem:[#allocation10] sm:$0xff]
    %v337 = vld [vmem:[#allocation10 + $0x8] sm:$0xff]
    %v338 = vld [vmem:[#allocation10 + $0x10] sm:$0xff]
    %v339 = vld [vmem:[#allocation10 + $0x18] sm:$0xff]
    %v340 = vld [vmem:[#allocation10 + $0x20] sm:$0xff]
    %v341 = vld [vmem:[#allocation10 + $0x28] sm:$0xff]
    %v342 = vld [vmem:[#allocation10 + $0x30] sm:$0xff]
    %v343 = vld [vmem:[#allocation10 + $0x38] sm:$0xff]
    %v344 = vld [vmem:[#allocation10 + $0x40] sm:$0xff]
    %v345 = vld [vmem:[#allocation10 + $0x48] sm:$0xff]
    %v346 = vld [vmem:[#allocation10 + $0x50] sm:$0xff]
    %v347 = vld [vmem:[#allocation10 + $0x58] sm:$0xff]
    %v348 = vld [vmem:[#allocation10 + $0x60] sm:$0xff]
    %v349 = vld [vmem:[#allocation10 + $0x68] sm:$0xff]
    %v350 = vld [vmem:[#allocation10 + $0x70] sm:$0xff]
    %v351 = vld [vmem:[#allocation10 + $0x78] sm:$0xff]
    %v352 = vld [vmem:[#allocation10 + $0x80] sm:$0xff]
    %v353 = vld [vmem:[#allocation10 + $0x88] sm:$0xff]
    %v354 = vld [vmem:[#allocation10 + $0x90] sm:$0xff]
    %v355 = vld [vmem:[#allocation10 + $0x98] sm:$0xff]
    %v356 = vld [vmem:[#allocation10 + $0xa0] sm:$0xff]
    %v357 = vld [vmem:[#allocation10 + $0xa8] sm:$0xff]
    %v358 = vld [vmem:[#allocation10 + $0xb0] sm:$0xff]
    %v359 = vld [vmem:[#allocation10 + $0xb8] sm:$0xff]
    %v360 = vld [vmem:[#allocation10 + $0xc0] sm:$0xff]
    %v361 = vld [vmem:[#allocation10 + $0xc8] sm:$0xff]
    %v362 = vld [vmem:[#allocation10 + $0xd0] sm:$0xff]
    %v363 = vld [vmem:[#allocation10 + $0xd8] sm:$0xff]
    %v364 = vld [vmem:[#allocation10 + $0xe0] sm:$0xff]
    %v365 = vld [vmem:[#allocation10 + $0xe8] sm:$0xff]
    %v366 = vld [vmem:[#allocation10 + $0xf0] sm:$0xff]
    %v367 = vld [vmem:[#allocation10 + $0xf8] sm:$0xff]
    %v368 = vld [vmem:[#allocation10 + $0x100] sm:$0xff]
    %v369 = vld [vmem:[#allocation10 + $0x108] sm:$0xff]
    %v370 = vld [vmem:[#allocation10 + $0x110] sm:$0xff]
    %v371 = vld [vmem:[#allocation10 + $0x118] sm:$0xff]
    %v372 = vld [vmem:[#allocation10 + $0x120] sm:$0xff]
    %v373 = vld [vmem:[#allocation10 + $0x128] sm:$0xff]
    %v374 = vld [vmem:[#allocation10 + $0x130] sm:$0xff]
    %v375 = vld [vmem:[#allocation10 + $0x138] sm:$0xff]
    %v376 = vld [vmem:[#allocation10 + $0x140] sm:$0xff]
    %v377 = vld [vmem:[#allocation10 + $0x148] sm:$0xff]
    %v378 = vld [vmem:[#allocation10 + $0x150] sm:$0xff]
    %v379 = vld [vmem:[#allocation10 + $0x158] sm:$0xff]
    %v380 = vld [vmem:[#allocation10 + $0x160] sm:$0xff]
    %v381 = vld [vmem:[#allocation10 + $0x168] sm:$0xff]
    %v382 = vld [vmem:[#allocation10 + $0x170] sm:$0xff]
    %v383 = vld [vmem:[#allocation10 + $0x178] sm:$0xff]
    %v384 = vld [vmem:[#allocation10 + $0x180] sm:$0xff]
    %v385 = vld [vmem:[#allocation10 + $0x188] sm:$0xff]
    %v386 = vld [vmem:[#allocation10 + $0x190] sm:$0xff]
    %v387 = vld [vmem:[#allocation10 + $0x198] sm:$0xff]
    %v388 = vld [vmem:[#allocation10 + $0x1a0] sm:$0xff]
    %v389 = vld [vmem:[#allocation10 + $0x1a8] sm:$0xff]
    %v390 = vld [vmem:[#allocation10 + $0x1b0] sm:$0xff]
    %v391 = vld [vmem:[#allocation10 + $0x1b8] sm:$0xff]
    %v392 = vld [vmem:[#allocation10 + $0x1c0] sm:$0xff]
    %v393 = vld [vmem:[#allocation10 + $0x1c8] sm:$0xff]
    %v394 = vld [vmem:[#allocation10 + $0x1d0] sm:$0xff]
    %v395 = vld [vmem:[#allocation10 + $0x1d8] sm:$0xff]
    %v396 = vld [vmem:[#allocation10 + $0x1e0] sm:$0xff]
    %v397 = vld [vmem:[#allocation10 + $0x1e8] sm:$0xff]
    %v398 = vld [vmem:[#allocation10 + $0x1f0] sm:$0xff]
    %v399 = vld [vmem:[#allocation10 + $0x1f8] sm:$0xff]
    %v400 = vld [vmem:[%s6] sm:$0x1]
    %v402 = vperm.slane %v400, 0
    %404 = vmatpush.msra.mxu0 %v351
    %405 = vmatpush.msra.mxu0 %v350
    %406 = vmatpush.msra.mxu0 %v349
    %407 = vmatpush.msra.mxu0 %v348
    %408 = vmatpush.msra.mxu0 %v347
    %409 = vmatpush.msra.mxu0 %v346
    %410 = vmatpush.msra.mxu0 %v345
    %411 = vmatpush.msra.mxu0 %v344
    %412 = vmatpush.msra.mxu0 %v343
    %413 = vmatpush.msra.mxu0 %v342
    %414 = vmatpush.msra.mxu0 %v341
    %415 = vmatpush.msra.mxu0 %v340
    %416 = vmatpush.msra.mxu0 %v339
    %417 = vmatpush.msra.mxu0 %v338
    %418 = vmatpush.msra.mxu0 %v337
    %419 = vmatpush.msra.mxu0 %v336
    %420 = vmatmul.f32.gmra.mxu0 %v328
    %v421 = vpop.f32.mrf.mxu0
    %v422 = vadd.f32 %v402, %v421
    %423 = vmatmul.f32.gmra.mxu0 %v332
    %v424 = vpop.f32.mrf.mxu0
    %v425 = vadd.f32 %v402, %v424
    %426 = vdwg.mxu0
    %427 = vmatpush.msra.mxu0 %v367
    %428 = vmatpush.msra.mxu0 %v366
    %429 = vmatpush.msra.mxu0 %v365
    %430 = vmatpush.msra.mxu0 %v364
    %431 = vmatpush.msra.mxu0 %v363
    %432 = vmatpush.msra.mxu0 %v362
    %433 = vmatpush.msra.mxu0 %v361
    %434 = vmatpush.msra.mxu0 %v360
    %435 = vmatpush.msra.mxu0 %v359
    %436 = vmatpush.msra.mxu0 %v358
    %437 = vmatpush.msra.mxu0 %v357
    %438 = vmatpush.msra.mxu0 %v356
    %439 = vmatpush.msra.mxu0 %v355
    %440 = vmatpush.msra.mxu0 %v354
    %441 = vmatpush.msra.mxu0 %v353
    %442 = vmatpush.msra.mxu0 %v352
    %443 = vmatmul.f32.gmra.mxu0 %v329
    %v444 = vpop.f32.mrf.mxu0
    %v445 = vadd.f32 %v422, %v444
    %446 = vmatmul.f32.gmra.mxu0 %v333
    %v447 = vpop.f32.mrf.mxu0
    %v448 = vadd.f32 %v425, %v447
    %449 = vdwg.mxu0
    %450 = vmatpush.msra.mxu0 %v383
    %451 = vmatpush.msra.mxu0 %v382
    %452 = vmatpush.msra.mxu0 %v381
    %453 = vmatpush.msra.mxu0 %v380
    %454 = vmatpush.msra.mxu0 %v379
    %455 = vmatpush.msra.mxu0 %v378
    %456 = vmatpush.msra.mxu0 %v377
    %457 = vmatpush.msra.mxu0 %v376
    %458 = vmatpush.msra.mxu0 %v375
    %459 = vmatpush.msra.mxu0 %v374
    %460 = vmatpush.msra.mxu0 %v373
    %461 = vmatpush.msra.mxu0 %v372
    %462 = vmatpush.msra.mxu0 %v371
    %463 = vmatpush.msra.mxu0 %v370
    %464 = vmatpush.msra.mxu0 %v369
    %465 = vmatpush.msra.mxu0 %v368
    %466 = vmatmul.f32.gmra.mxu0 %v330
    %v467 = vpop.f32.mrf.mxu0
    %v468 = vadd.f32 %v445, %v467
    %469 = vmatmul.f32.gmra.mxu0 %v334
    %v470 = vpop.f32.mrf.mxu0
    %v471 = vadd.f32 %v448, %v470
    %472 = vdwg.mxu0
    %473 = vmatpush.msra.mxu0 %v399
    %474 = vmatpush.msra.mxu0 %v398
    %475 = vmatpush.msra.mxu0 %v397
    %476 = vmatpush.msra.mxu0 %v396
    %477 = vmatpush.msra.mxu0 %v395
    %478 = vmatpush.msra.mxu0 %v394
    %479 = vmatpush.msra.mxu0 %v393
    %480 = vmatpush.msra.mxu0 %v392
    %481 = vmatpush.msra.mxu0 %v391
    %482 = vmatpush.msra.mxu0 %v390
    %483 = vmatpush.msra.mxu0 %v389
    %484 = vmatpush.msra.mxu0 %v388
    %485 = vmatpush.msra.mxu0 %v387
    %486 = vmatpush.msra.mxu0 %v386
    %487 = vmatpush.msra.mxu0 %v385
    %488 = vmatpush.msra.mxu0 %v384
    %489 = vmatmul.f32.gmra.mxu0 %v331
    %v490 = vpop.f32.mrf.mxu0
    %v491 = vadd.f32 %v468, %v490
    %492 = vmatmul.f32.gmra.mxu0 %v335
    %v493 = vpop.f32.mrf.mxu0
    %v494 = vadd.f32 %v471, %v493
    %495 = vdwg.mxu0
    %496 = vst [vmem:[#allocation11] sm:$0xff] %v491
    %497 = vst [vmem:[#allocation11 + $0x8] sm:$0xff] %v494
    // Predicated region
    $region50: #{tpu_custom_call.1} parent=1 // pred_check
      _
    $region51: #{tpu_custom_call.1} parent=1 // pred_check_branch
      %499 = sbr.rel (0) target = $region53
    $region52: #{tpu_custom_call.1} parent=1 // pred_region
      %501 = vsyncadd [#allocation4], 0
      %s502 = sshll.u32 [#allocation11], 4
      %s503 = int_to_ptr.vmem [resolvable:$true] %s502
      %s504 = sshll.u32 %s7, 4
      %s505 = int_to_ptr.hbm [resolvable:$true] %s504
      %510 = dma.vmem_to_hbm [thread:$0]  %s503, 256, %s505, [#allocation4], 128, 128, 8
    $region53: #{tpu_custom_call.1} parent=1 // pred_fallthru
      _
    // Predicated region
    $region54: #{tpu_custom_call.1} parent=1 // pred_check
      _
    $region55: #{tpu_custom_call.1} parent=1 // pred_check_branch
      %512 = sbr.rel (0) target = $region57
    $region56: #{tpu_custom_call.1} parent=1 // pred_region
      %514 = dma.done [#allocation4], 256
    $region57: #{tpu_custom_call.1} parent=1 // pred_fallthru
      _
    %515 = vsyncpa [#allocation3], 1
    %516 = vsyncpa [#allocation6], 1
    %517 = vsyncpa [#allocation9], 1
    %518 = vsyncpa [#allocation4], 1

</llo_original>
